<compile_context>
chip_gen: v7x
topology: tpu7x:2x2x1
jax: 0.10.0
libtpu: 0.0.40
codegen_flags: <defaults>
</compile_context>

<pallas_src>
import math

import jax
import jax.numpy as jnp
from jax.experimental import pallas as pl
from jax.experimental.pallas import tpu as pltpu


def _round_up(a, m):
    return ((a + m - 1) // m) * m


def _leaky_relu(x, slope=0.2):
    # Equivalent to where(x>0, x, slope*x) for slope in (0,1); one fewer VALU op.
    return jnp.maximum(x, slope * x)


def discriminator_kernel(x_ref, w1_ref, b1_ref, w2_ref, b2_ref, w3_ref, b3_ref,
                         o_ref):
    # x tile: (TB, 784) bf16 straight off the DMA; accumulate in f32 on the MXU.
    x = x_ref[...]

    h1 = jnp.dot(x, w1_ref[...], preferred_element_type=jnp.float32)
    h1 = _leaky_relu(h1 + b1_ref[...])                       # f32, (TB, 512)

    h2 = jnp.dot(h1.astype(jnp.bfloat16), w2_ref[...],
                 preferred_element_type=jnp.float32)
    h2 = _leaky_relu(h2 + b2_ref[...])                       # f32, (TB, 256)

    # Layer 3 (256 -> 1): VPU multiply + lane reduction instead of an N=1 MXU
    # matmul. w3_ref is the (1, 256) f32 weight row.
    logits = jnp.sum(h2 * w3_ref[...], axis=-1, keepdims=True) + b3_ref[...]

    # Sigmoid: EUP exp + approx reciprocal (both live on the EUP slot).
    o_ref[...] = pl.reciprocal(1.0 + jnp.exp(-logits), approx=True).astype(
        o_ref.dtype)


def discriminator_forward(x, params, *, block_b=1024):
    """x: (B, 784), ideally already bfloat16 (f32 is cast on entry).
    params: (w1 bf16 (784,512), b1 f32 (1,512),
             w2 bf16 (512,256), b2 f32 (1,256),
             w3 f32  (1,256),   b3 f32 (1,1))."""
    w1, b1, w2, b2, w3, b3 = params
    B, F = x.shape

    # Stream x as bf16 (producer should already supply bf16; this cast fuses
    # upstream under jit rather than adding a standalone HBM round trip).
    if x.dtype != jnp.bfloat16:
        x = x.astype(jnp.bfloat16)

    # Batch tile: multiples of 16 sublanes (bf16 packing), capped by the
    # padded batch, the requested block_b, and a ">= 4 grid steps" rule so
    # both v7x TensorCores get at least 2 tiles each (no-op on v5e/v6e).
    SUB = 16
    B_sub = _round_up(B, SUB)
    tb_target = max(SUB, min(_round_up(block_b, SUB), B_sub))
    tb_cap4 = max(SUB, _round_up(-(-B_sub // 4), SUB))
    TB = min(tb_target, tb_cap4)

    Bp = _round_up(B, TB)
    if Bp != B:
        x = jnp.pad(x, ((0, Bp - B), (0, 0)))

    def const(shape):
        # Resident operand: constant index_map, single-buffered (DMA'd once).
        return pl.BlockSpec(shape, lambda i: (0,) * len(shape),
                            pipeline_mode=pl.Buffered(1))

    out = pl.pallas_call(
        discriminator_kernel,
        out_shape=jax.ShapeDtypeStruct((Bp, 1), jnp.float32),
        grid_spec=pltpu.PrefetchScalarGridSpec(
            num_scalar_prefetch=0,
            grid=(Bp // TB,),
            in_specs=[
                pl.BlockSpec((TB, F), lambda i: (i, 0)),    # x: tiled, bf16
                const(w1.shape), const(b1.shape),            # weights resident
                const(w2.shape), const(b2.shape),
                const(w3.shape), const(b3.shape),
            ],
            out_specs=pl.BlockSpec((TB, 1), lambda i: (i, 0)),
        ),
        compiler_params=pltpu.CompilerParams(
            dimension_semantics=("parallel",),   # shard batch tiles on v7x
        ),
    )(x, w1, b1, w2, b2, w3, b3)

    return out[:B]


# ----------------------------------------------------------------------------
# Parameter init / references
# ----------------------------------------------------------------------------

def init_params_f32(key):
    """torch.nn.Linear default init U(-1/sqrt(fan_in), 1/sqrt(fan_in)), f32."""
    dims = [(784, 512), (512, 256), (256, 1)]
    params = []
    for fan_in, fan_out in dims:
        kw, kb, key = jax.random.split(key, 3)
        bound = 1.0 / math.sqrt(fan_in)
        w = jax.random.uniform(kw, (fan_in, fan_out), jnp.float32, -bound, bound)
        b = jax.random.uniform(kb, (1, fan_out), jnp.float32, -bound, bound)
        params.extend([w, b])
    return tuple(params)


def prepare_params(params_f32):
    """Cast to the kernel dtype plan: big weights bf16, w3 as (1,256) f32 row."""
    w1, b1, w2, b2, w3, b3 = params_f32
    return (w1.astype(jnp.bfloat16), b1,
            w2.astype(jnp.bfloat16), b2,
            w3.T, b3)


def reference_mirror(x_bf16, params):
    """Same dtype plan as the kernel (bf16 matmul inputs, f32 accumulation)."""
    w1, b1, w2, b2, w3, b3 = params
    h1 = _leaky_relu(jnp.dot(x_bf16, w1,
                             preferred_element_type=jnp.float32) + b1)
    h2 = _leaky_relu(jnp.dot(h1.astype(jnp.bfloat16), w2,
                             preferred_element_type=jnp.float32) + b2)
    logits = jnp.sum(h2 * w3, axis=-1, keepdims=True) + b3
    return jax.nn.sigmoid(logits)


def reference_f32(x, params_f32):
    """Pure f32 reference matching the original PyTorch module semantics."""
    w1, b1, w2, b2, w3, b3 = params_f32
    h1 = _leaky_relu(x @ w1 + b1)
    h2 = _leaky_relu(h1 @ w2 + b2)
    return jax.nn.sigmoid(h2 @ w3 + b3)


if __name__ == "__main__":
    key = jax.random.PRNGKey(0)
    kx, kp = jax.random.split(key)

    B = 40                                   # small batch; not a tile multiple
    x_f32 = jax.random.normal(kx, (B, 784), jnp.float32)
    x = x_f32.astype(jnp.bfloat16)           # producer supplies bf16 x

    params_f32 = init_params_f32(kp)
    params = prepare_params(params_f32)

    # Default block_b=1024, but the >=4-step rule caps TB at 16 here
    # (pad to 48 rows, 3x16-row tiles) — exercises tiling + padding.
    out = jax.block_until_ready(discriminator_forward(x, params))
    assert out.shape == (B, 1), out.shape

    ref_m = reference_mirror(x, params)      # same bf16/f32 plan as kernel
    ref_f = reference_f32(x_f32, params_f32) # original module, full f32

    err_m = float(jnp.max(jnp.abs(out - ref_m)))
    err_f = float(jnp.max(jnp.abs(out - ref_f)))
    assert err_m < 5e-3, f"mirror-plan max abs err {err_m}"
    assert err_f < 3e-2, f"f32-reference max abs err {err_f}"

    print("KERNEL_OK")
</pallas_src>

<mosaic_0001>
module attributes {stable_mosaic.version = 11 : i64} {
  func.func @discriminator_kernel(%arg0: i32, %arg1: memref<16x784xbf16, #tpu.memory_space<vmem>>, %arg2: memref<784x512xbf16, #tpu.memory_space<vmem>>, %arg3: memref<1x512xf32, #tpu.memory_space<vmem>>, %arg4: memref<512x256xbf16, #tpu.memory_space<vmem>>, %arg5: memref<1x256xf32, #tpu.memory_space<vmem>>, %arg6: memref<1x256xf32, #tpu.memory_space<vmem>>, %arg7: memref<1x1xf32, #tpu.memory_space<vmem>>, %arg8: memref<16x1xf32, #tpu.memory_space<vmem>>) attributes {dimension_semantics = [#tpu.dimension_semantics<parallel>], iteration_bounds = array<i64: 3>, scalar_prefetch = 0 : i64, scratch_operands = 0 : i64, tpu.core_type = #tpu.core_type<tc>, window_params = [{transform_indices = @transform_0, window_bounds = array<i64: 16, 784>}, {pipeline_mode = #tpu.pipeline_mode<synchronous>, transform_indices = @transform_1, window_bounds = array<i64: 784, 512>}, {pipeline_mode = #tpu.pipeline_mode<synchronous>, transform_indices = @transform_2, window_bounds = array<i64: 1, 512>}, {pipeline_mode = #tpu.pipeline_mode<synchronous>, transform_indices = @transform_3, window_bounds = array<i64: 512, 256>}, {pipeline_mode = #tpu.pipeline_mode<synchronous>, transform_indices = @transform_4, window_bounds = array<i64: 1, 256>}, {pipeline_mode = #tpu.pipeline_mode<synchronous>, transform_indices = @transform_5, window_bounds = array<i64: 1, 256>}, {pipeline_mode = #tpu.pipeline_mode<synchronous>, transform_indices = @transform_6, window_bounds = array<i64: 1, 1>}, {transform_indices = @transform_7, window_bounds = array<i64: 16, 1>}]} {
    %c0 = arith.constant 0 : index
    %c0_0 = arith.constant 0 : index
    %0 = vector.load %arg1[%c0, %c0_0] : memref<16x784xbf16, #tpu.memory_space<vmem>>, vector<16x784xbf16>
    %c0_1 = arith.constant 0 : index
    %c0_2 = arith.constant 0 : index
    %1 = vector.load %arg2[%c0_1, %c0_2] : memref<784x512xbf16, #tpu.memory_space<vmem>>, vector<784x512xbf16>
    %cst = arith.constant dense<0.000000e+00> : vector<16x512xf32>
    %2 = tpu.matmul %0, %1, %cst {dimension_numbers = #tpu.dot_dimension_numbers<[1], [0], [0], [1], [0, 0, 1, 1], [], []>} : vector<16x784xbf16>, vector<784x512xbf16>, vector<16x512xf32> -> vector<16x512xf32>
    %c0_3 = arith.constant 0 : index
    %c0_4 = arith.constant 0 : index
    %3 = vector.load %arg3[%c0_3, %c0_4] : memref<1x512xf32, #tpu.memory_space<vmem>>, vector<1x512xf32>
    %4 = vector.broadcast %3 : vector<1x512xf32> to vector<16x512xf32>
    %5 = arith.addf %2, %4 : vector<16x512xf32>
    %cst_5 = arith.constant 2.000000e-01 : f32
    %6 = vector.broadcast %cst_5 : f32 to vector<16x512xf32>
    %7 = arith.mulf %6, %5 : vector<16x512xf32>
    %8 = arith.maximumf %5, %7 : vector<16x512xf32>
    %9 = arith.truncf %8 : vector<16x512xf32> to vector<16x512xbf16>
    %c0_6 = arith.constant 0 : index
    %c0_7 = arith.constant 0 : index
    %10 = vector.load %arg4[%c0_6, %c0_7] : memref<512x256xbf16, #tpu.memory_space<vmem>>, vector<512x256xbf16>
    %cst_8 = arith.constant dense<0.000000e+00> : vector<16x256xf32>
    %11 = tpu.matmul %9, %10, %cst_8 {dimension_numbers = #tpu.dot_dimension_numbers<[1], [0], [0], [1], [0, 0, 1, 1], [], []>} : vector<16x512xbf16>, vector<512x256xbf16>, vector<16x256xf32> -> vector<16x256xf32>
    %c0_9 = arith.constant 0 : index
    %c0_10 = arith.constant 0 : index
    %12 = vector.load %arg5[%c0_9, %c0_10] : memref<1x256xf32, #tpu.memory_space<vmem>>, vector<1x256xf32>
    %13 = vector.broadcast %12 : vector<1x256xf32> to vector<16x256xf32>
    %14 = arith.addf %11, %13 : vector<16x256xf32>
    %cst_11 = arith.constant 2.000000e-01 : f32
    %15 = vector.broadcast %cst_11 : f32 to vector<16x256xf32>
    %16 = arith.mulf %15, %14 : vector<16x256xf32>
    %17 = arith.maximumf %14, %16 : vector<16x256xf32>
    %c0_12 = arith.constant 0 : index
    %c0_13 = arith.constant 0 : index
    %18 = vector.load %arg6[%c0_12, %c0_13] : memref<1x256xf32, #tpu.memory_space<vmem>>, vector<1x256xf32>
    %19 = vector.broadcast %18 : vector<1x256xf32> to vector<16x256xf32>
    %20 = arith.mulf %17, %19 : vector<16x256xf32>
    %cst_14 = arith.constant dense<0.000000e+00> : vector<16xf32>
    %21 = vector.multi_reduction <add>, %20, %cst_14 [1] : vector<16x256xf32> to vector<16xf32>
    %22 = vector.shape_cast %21 : vector<16xf32> to vector<16x1xf32>
    %c0_15 = arith.constant 0 : index
    %c0_16 = arith.constant 0 : index
    %23 = vector.load %arg7[%c0_15, %c0_16] : memref<1x1xf32, #tpu.memory_space<vmem>>, vector<1x1xf32>
    %24 = vector.broadcast %23 : vector<1x1xf32> to vector<16x1xf32>
    %25 = arith.addf %22, %24 : vector<16x1xf32>
    %cst_17 = arith.constant 0.000000e+00 : f32
    %26 = vector.broadcast %cst_17 : f32 to vector<16x1xf32>
    %27 = arith.subf %26, %25 : vector<16x1xf32>
    %28 = math.exp %27 : vector<16x1xf32>
    %cst_18 = arith.constant 1.000000e+00 : f32
    %29 = vector.broadcast %cst_18 : f32 to vector<16x1xf32>
    %30 = arith.addf %29, %28 : vector<16x1xf32>
    %31 = tpu.reciprocal %30 {approx = true} : vector<16x1xf32> -> vector<16x1xf32>
    %c0_19 = arith.constant 0 : index
    %c0_20 = arith.constant 0 : index
    %32 = vector.load %arg8[%c0_19, %c0_20] : memref<16x1xf32, #tpu.memory_space<vmem>>, vector<16x1xf32>
    tpu.vector_store %arg8[%c0_19, %c0_20], %31 {strides = array<i32>} : memref<16x1xf32, #tpu.memory_space<vmem>>, vector<16x1xf32>,
    return
  }
  func.func @transform_0(%arg0: i32) -> (i32, i32) {
    %c0_i32 = arith.constant 0 : i32
    %c0_i32_0 = arith.constant 0 : i32
    return %arg0, %c0_i32 : i32, i32
  }
  func.func @transform_1(%arg0: i32) -> (i32, i32) {
    %c0_i32 = arith.constant 0 : i32
    %c0_i32_0 = arith.constant 0 : i32
    %c0_i32_1 = arith.constant 0 : i32
    return %c0_i32, %c0_i32_0 : i32, i32
  }
  func.func @transform_2(%arg0: i32) -> (i32, i32) {
    %c0_i32 = arith.constant 0 : i32
    %c0_i32_0 = arith.constant 0 : i32
    %c0_i32_1 = arith.constant 0 : i32
    return %c0_i32, %c0_i32_0 : i32, i32
  }
  func.func @transform_3(%arg0: i32) -> (i32, i32) {
    %c0_i32 = arith.constant 0 : i32
    %c0_i32_0 = arith.constant 0 : i32
    %c0_i32_1 = arith.constant 0 : i32
    return %c0_i32, %c0_i32_0 : i32, i32
  }
  func.func @transform_4(%arg0: i32) -> (i32, i32) {
    %c0_i32 = arith.constant 0 : i32
    %c0_i32_0 = arith.constant 0 : i32
    %c0_i32_1 = arith.constant 0 : i32
    return %c0_i32, %c0_i32_0 : i32, i32
  }
  func.func @transform_5(%arg0: i32) -> (i32, i32) {
    %c0_i32 = arith.constant 0 : i32
    %c0_i32_0 = arith.constant 0 : i32
    %c0_i32_1 = arith.constant 0 : i32
    return %c0_i32, %c0_i32_0 : i32, i32
  }
  func.func @transform_6(%arg0: i32) -> (i32, i32) {
    %c0_i32 = arith.constant 0 : i32
    %c0_i32_0 = arith.constant 0 : i32
    %c0_i32_1 = arith.constant 0 : i32
    return %c0_i32, %c0_i32_0 : i32, i32
  }
  func.func @transform_7(%arg0: i32) -> (i32, i32) {
    %c0_i32 = arith.constant 0 : i32
    %c0_i32_0 = arith.constant 0 : i32
    return %arg0, %c0_i32 : i32, i32
  }
}

</mosaic_0001>

<llo_original>
// kernel: tpu_custom_call.1
$region0: #{tpu_custom_call.1}
  #allocation0 [shape = 'u32[]', space=smem, size = 0x4, offset = 0x4, fixed_abs, tag = 'smem constant byte address 0x4 - core index']
  #allocation1 [shape = 'u32[144,128]{1,0:T(1,128)}', space=vmem, size = 0x12000, scoped, tag = 'internal scratch']
  #allocation2 [shape = 'f32[1,1]{1,0:T(1,128)S(1)}', space=vmem, size = 0x200, scoped, tag = 'scoped memory for tpu_custom_call.1']
  %s0 = inlined_call_operand.hbm [shape: bf16[48,784], index: 0, kind: input, shape index: {}]
  %s1 = inlined_call_operand.hbm [shape: bf16[784,512], index: 1, kind: input, shape index: {}]
  %s2 = inlined_call_operand.vmem [shape: f32[1,512], index: 2, kind: input, shape index: {}]
  %s3 = inlined_call_operand.hbm [shape: bf16[512,256], index: 3, kind: input, shape index: {}]
  %s4 = inlined_call_operand.vmem [shape: f32[1,256], index: 4, kind: input, shape index: {}]
  %s5 = inlined_call_operand.vmem [shape: f32[1,256], index: 5, kind: input, shape index: {}]
  %s6 = inlined_call_operand.<no memory space> [shape: f32[1,1], index: 6, kind: input, shape index: {}]
  %s7 = inlined_call_operand.vmem [shape: f32[48,1], index: 7, kind: output, shape index: {}]
  %s8 = sld [smem:[#allocation0]]
  $region73: #{tpu_custom_call.1} parent=0
    _
  %s10 = ssub.s32 1, %s8
  %s11 = scalar_select 0, %s10, %s8
  %v12 = vstv %s6
  %13 = vst [vmem:[#allocation2] sm:$0x1] %v12
  $region1: #{tpu_custom_call.1} parent=0
    #allocation3 [shape = 'u8[57344]{0}', space=vmem, size = 0xe000, scoped, tag = 'input window, operand 0']
    #allocation4 [shape = 's32[2]{0}', space=sflag, size = 0x8, scoped, tag = 'scoped memory for tpu_custom_call.1']
    #allocation5 [shape = 'u8[802816]{0}', space=vmem, size = 0xc4000, scoped, tag = 'input window, operand 1, single buffered']
    #allocation6 [shape = 's32[1]{0}', space=sflag, size = 0x4, scoped, tag = 'scoped memory for tpu_custom_call.1']
    #allocation7 [shape = 'u8[262144]{0}', space=vmem, size = 0x40000, scoped, tag = 'input window, operand 3, single buffered']
    %14 = vsyncpa [#allocation4], 0
    %s15 = scalar_lea.sflag [#allocation4], 1
    %16 = vsyncpa %s15, 0
    %17 = vsyncpa [#allocation6], 0
    loop: start=0, step=1, limit=5
    $region2: #{tpu_custom_call.1} parent=1 // loop_pre_header
      _
    $region3: #{tpu_custom_call.1} parent=1 // loop_header
      %s19 = sphi 0, %s23
      %p20 = scmp.ge.s32.totalorder %s19, 5
      %s29 = sphi 0, %s31
      %s32 = sphi 0, %s29
      %s33 = sphi 0, %s32
      %s49 = sphi 0, %s33
      %s53 = sphi 0, %s53
      %s55 = sphi 0, %s53
      %s56 = sphi 0, %s55
      %s70 = sphi 0, %s56
      %s74 = sphi 0, %s74
      %s76 = sphi 0, %s74
      %s77 = sphi 0, %s76
      %s91 = sphi 0, %s77
      %s95 = sphi 0, %s95
      %s97 = sphi 0, %s95
      %s98 = sphi 0, %s97
      %s112 = sphi 0, %s98
      %s116 = sphi 0, %s116
      %s118 = sphi 0, %s116
      %s119 = sphi 0, %s118
      %s133 = sphi 0, %s119
      %s137 = sphi 0, %s137
      %s139 = sphi 0, %s137
      %s140 = sphi 0, %s139
      %s154 = sphi 0, %s140
      %s158 = sphi 0, %s158
      %s160 = sphi 0, %s158
      %s161 = sphi 0, %s160
      %s175 = sphi 0, %s161
      %s181 = sphi 0, %s183
      %s184 = sphi 0, %s181
      %s185 = sphi 0, %s184
      %s201 = sphi 0, %s185
    $region4: #{tpu_custom_call.1} parent=1 // loop_header_branch
      %22 = sbr.rel (%p20) target = $region8
    $region5: #{tpu_custom_call.1} parent=1 // loop_body
      %s24 = ssub.s32 %s19, 1
      %s25 = ssub.s32 %s19, 2
      %s26 = sadd.s32 %s19, 1
      %s27 = ssub.s32 %s19, %s26
      %p28 = scmp.eq.s32.totalorder %s27, 0
      %s30 = sadd.s32 %s29, 1
      %s31 = scalar_select %p28, %s29, %s30
      %p34 = pneg %p28
      %p35 = scmp.eq.s32.totalorder %s19, 2
      %p36 = por %p34, %p35
      %p37 = scmp.ne.s32.totalorder %s29, %s32
      %p38 = scmp.eq.s32.totalorder %s19, 0
      %p39 = por %p37, %p38
      %p40 = scmp.ne.s32.totalorder %s29, %s32
      %p41 = scmp.eq.s32.totalorder %s24, 2
      %p42 = por %p40, %p41
      %p43 = scmp.ne.s32.totalorder %s32, %s33
      %p44 = scmp.eq.s32.totalorder %s24, 0
      %p45 = por %p43, %p44
      %p46 = scmp.ne.s32.totalorder %s32, %s33
      %p47 = scmp.eq.s32.totalorder %s25, 2
      %p48 = por %p46, %p47
      %p50 = scmp.ne.s32.totalorder %s33, %s49
      %p51 = scmp.eq.s32.totalorder %s25, 0
      %p52 = por %p50, %p51
      %s54 = sadd.s32 %s53, 1
      %p57 = scmp.eq.s32.totalorder %s19, 2
      %p58 = scmp.ne.s32.totalorder %s53, %s55
      %p59 = scmp.eq.s32.totalorder %s19, 0
      %p60 = por %p58, %p59
      %p61 = scmp.ne.s32.totalorder %s53, %s55
      %p62 = scmp.eq.s32.totalorder %s24, 2
      %p63 = por %p61, %p62
      %p64 = scmp.ne.s32.totalorder %s55, %s56
      %p65 = scmp.eq.s32.totalorder %s24, 0
      %p66 = por %p64, %p65
      %p67 = scmp.ne.s32.totalorder %s55, %s56
      %p68 = scmp.eq.s32.totalorder %s25, 2
      %p69 = por %p67, %p68
      %p71 = scmp.ne.s32.totalorder %s56, %s70
      %p72 = scmp.eq.s32.totalorder %s25, 0
      %p73 = por %p71, %p72
      %s75 = sadd.s32 %s74, 1
      %p78 = scmp.eq.s32.totalorder %s19, 2
      %p79 = scmp.ne.s32.totalorder %s74, %s76
      %p80 = scmp.eq.s32.totalorder %s19, 0
      %p81 = por %p79, %p80
      %p82 = scmp.ne.s32.totalorder %s74, %s76
      %p83 = scmp.eq.s32.totalorder %s24, 2
      %p84 = por %p82, %p83
      %p85 = scmp.ne.s32.totalorder %s76, %s77
      %p86 = scmp.eq.s32.totalorder %s24, 0
      %p87 = por %p85, %p86
      %p88 = scmp.ne.s32.totalorder %s76, %s77
      %p89 = scmp.eq.s32.totalorder %s25, 2
      %p90 = por %p88, %p89
      %p92 = scmp.ne.s32.totalorder %s77, %s91
      %p93 = scmp.eq.s32.totalorder %s25, 0
      %p94 = por %p92, %p93
      %s96 = sadd.s32 %s95, 1
      %p99 = scmp.eq.s32.totalorder %s19, 2
      %p100 = scmp.ne.s32.totalorder %s95, %s97
      %p101 = scmp.eq.s32.totalorder %s19, 0
      %p102 = por %p100, %p101
      %p103 = scmp.ne.s32.totalorder %s95, %s97
      %p104 = scmp.eq.s32.totalorder %s24, 2
      %p105 = por %p103, %p104
      %p106 = scmp.ne.s32.totalorder %s97, %s98
      %p107 = scmp.eq.s32.totalorder %s24, 0
      %p108 = por %p106, %p107
      %p109 = scmp.ne.s32.totalorder %s97, %s98
      %p110 = scmp.eq.s32.totalorder %s25, 2
      %p111 = por %p109, %p110
      %p113 = scmp.ne.s32.totalorder %s98, %s112
      %p114 = scmp.eq.s32.totalorder %s25, 0
      %p115 = por %p113, %p114
      %s117 = sadd.s32 %s116, 1
      %p120 = scmp.eq.s32.totalorder %s19, 2
      %p121 = scmp.ne.s32.totalorder %s116, %s118
      %p122 = scmp.eq.s32.totalorder %s19, 0
      %p123 = por %p121, %p122
      %p124 = scmp.ne.s32.totalorder %s116, %s118
      %p125 = scmp.eq.s32.totalorder %s24, 2
      %p126 = por %p124, %p125
      %p127 = scmp.ne.s32.totalorder %s118, %s119
      %p128 = scmp.eq.s32.totalorder %s24, 0
      %p129 = por %p127, %p128
      %p130 = scmp.ne.s32.totalorder %s118, %s119
      %p131 = scmp.eq.s32.totalorder %s25, 2
      %p132 = por %p130, %p131
      %p134 = scmp.ne.s32.totalorder %s119, %s133
      %p135 = scmp.eq.s32.totalorder %s25, 0
      %p136 = por %p134, %p135
      %s138 = sadd.s32 %s137, 1
      %p141 = scmp.eq.s32.totalorder %s19, 2
      %p142 = scmp.ne.s32.totalorder %s137, %s139
      %p143 = scmp.eq.s32.totalorder %s19, 0
      %p144 = por %p142, %p143
      %p145 = scmp.ne.s32.totalorder %s137, %s139
      %p146 = scmp.eq.s32.totalorder %s24, 2
      %p147 = por %p145, %p146
      %p148 = scmp.ne.s32.totalorder %s139, %s140
      %p149 = scmp.eq.s32.totalorder %s24, 0
      %p150 = por %p148, %p149
      %p151 = scmp.ne.s32.totalorder %s139, %s140
      %p152 = scmp.eq.s32.totalorder %s25, 2
      %p153 = por %p151, %p152
      %p155 = scmp.ne.s32.totalorder %s140, %s154
      %p156 = scmp.eq.s32.totalorder %s25, 0
      %p157 = por %p155, %p156
      %s159 = sadd.s32 %s158, 1
      %p162 = scmp.eq.s32.totalorder %s19, 2
      %p163 = scmp.ne.s32.totalorder %s158, %s160
      %p164 = scmp.eq.s32.totalorder %s19, 0
      %p165 = por %p163, %p164
      %p166 = scmp.ne.s32.totalorder %s158, %s160
      %p167 = scmp.eq.s32.totalorder %s24, 2
      %p168 = por %p166, %p167
      %p169 = scmp.ne.s32.totalorder %s160, %s161
      %p170 = scmp.eq.s32.totalorder %s24, 0
      %p171 = por %p169, %p170
      %p172 = scmp.ne.s32.totalorder %s160, %s161
      %p173 = scmp.eq.s32.totalorder %s25, 2
      %p174 = por %p172, %p173
      %p176 = scmp.ne.s32.totalorder %s161, %s175
      %p177 = scmp.eq.s32.totalorder %s25, 0
      %p178 = por %p176, %p177
      %s179 = ssub.s32 %s19, %s26
      %p180 = scmp.eq.s32.totalorder %s179, 0
      %s182 = sadd.s32 %s181, 1
      %s183 = scalar_select %p180, %s181, %s182
      %p186 = pneg %p180
      %p187 = scmp.eq.s32.totalorder %s19, 2
      %p188 = por %p186, %p187
      %p189 = scmp.ne.s32.totalorder %s181, %s184
      %p190 = scmp.eq.s32.totalorder %s19, 0
      %p191 = por %p189, %p190
      %p192 = scmp.ne.s32.totalorder %s181, %s184
      %p193 = scmp.eq.s32.totalorder %s24, 2
      %p194 = por %p192, %p193
      %p195 = scmp.ne.s32.totalorder %s184, %s185
      %p196 = scmp.eq.s32.totalorder %s24, 0
      %p197 = por %p195, %p196
      %p198 = scmp.ne.s32.totalorder %s184, %s185
      %p199 = scmp.eq.s32.totalorder %s25, 2
      %p200 = por %p198, %p199
      %p202 = scmp.ne.s32.totalorder %s185, %s201
      %p203 = scmp.eq.s32.totalorder %s25, 0
      %p204 = por %p202, %p203
      %p205 = scmp.le.s32.totalorder 1, %s19
      %p206 = scmp.lt.s32.totalorder %s19, 4
      %p207 = pnand %p205, %p206
      %p208 = pneg %p207
      // Predicated region
      $region9: #{tpu_custom_call.1} parent=5 // pred_check
        _
      $region10: #{tpu_custom_call.1} parent=5 // pred_check_branch
        %210 = sbr.rel (%p207) target = $region12
      $region11: #{tpu_custom_call.1} parent=5 // pred_region
        %s211 = ssub.s32 %s19, 1
        // Predicated region
        $region13: #{tpu_custom_call.1} parent=11 // pred_check
          %p212 = pneg %p66
        $region14: #{tpu_custom_call.1} parent=11 // pred_check_branch
          %214 = sbr.rel (%p212) target = $region16
        $region15: #{tpu_custom_call.1} parent=11 // pred_region
          %s216 = ssub.s32 25088, 25088
          %217 = vsyncadd [#allocation6], %s216
          %s218 = sshll.u32 [#allocation5], 4
          %s219 = int_to_ptr.vmem [resolvable:$true] %s218
          %224 = dma.hbm_to_vmem [thread:$0]  %s1, 25088, %s219, [#allocation6], 256, 256, 16
        $region16: #{tpu_custom_call.1} parent=11 // pred_fallthru
          _
        // Predicated region
        $region17: #{tpu_custom_call.1} parent=11 // pred_check
          %p225 = pneg %p87
        $region18: #{tpu_custom_call.1} parent=11 // pred_check_branch
          %227 = sbr.rel (%p225) target = $region20
        $region19: #{tpu_custom_call.1} parent=11 // pred_region
          _
        $region20: #{tpu_custom_call.1} parent=11 // pred_fallthru
          _
        // Predicated region
        $region21: #{tpu_custom_call.1} parent=11 // pred_check
          %p228 = pneg %p108
        $region22: #{tpu_custom_call.1} parent=11 // pred_check_branch
          %230 = sbr.rel (%p228) target = $region24
        $region23: #{tpu_custom_call.1} parent=11 // pred_region
          %s232 = ssub.s32 8192, 8192
          %233 = vsyncadd [#allocation6], %s232
          %s234 = sshll.u32 [#allocation7], 4
          %s235 = int_to_ptr.vmem [resolvable:$true] %s234
          %240 = dma.hbm_to_vmem [thread:$0]  %s3, 8192, %s235, [#allocation6], 128, 128, 8
        $region24: #{tpu_custom_call.1} parent=11 // pred_fallthru
          _
        // Predicated region
        $region25: #{tpu_custom_call.1} parent=11 // pred_check
          %p241 = pneg %p129
        $region26: #{tpu_custom_call.1} parent=11 // pred_check_branch
          %243 = sbr.rel (%p241) target = $region28
        $region27: #{tpu_custom_call.1} parent=11 // pred_region
          _
        $region28: #{tpu_custom_call.1} parent=11 // pred_fallthru
          _
        // Predicated region
        $region29: #{tpu_custom_call.1} parent=11 // pred_check
          %p244 = pneg %p150
        $region30: #{tpu_custom_call.1} parent=11 // pred_check_branch
          %246 = sbr.rel (%p244) target = $region32
        $region31: #{tpu_custom_call.1} parent=11 // pred_region
          _
        $region32: #{tpu_custom_call.1} parent=11 // pred_fallthru
          _
        // Predicated region
        $region33: #{tpu_custom_call.1} parent=11 // pred_check
          %p247 = pneg %p171
        $region34: #{tpu_custom_call.1} parent=11 // pred_check_branch
          %249 = sbr.rel (%p247) target = $region36
        $region35: #{tpu_custom_call.1} parent=11 // pred_region
          _
        $region36: #{tpu_custom_call.1} parent=11 // pred_fallthru
          _
      $region12: #{tpu_custom_call.1} parent=5 // pred_fallthru
        _
      %p250 = scmp.lt.s32.totalorder %s19, 3
      // Predicated region
      $region37: #{tpu_custom_call.1} parent=5 // pred_check
        %p251 = pneg %p250
      $region38: #{tpu_custom_call.1} parent=5 // pred_check_branch
        %253 = sbr.rel (%p251) target = $region40
      $region39: #{tpu_custom_call.1} parent=5 // pred_region
        // Predicated region
        $region41: #{tpu_custom_call.1} parent=39 // pred_check
          %p254 = pneg %p39
        $region42: #{tpu_custom_call.1} parent=39 // pred_check_branch
          %256 = sbr.rel (%p254) target = $region44
        $region43: #{tpu_custom_call.1} parent=39 // pred_region
          %s257 = sand.u32 %s29, 1
          %s258 = scalar_lea.sflag [#allocation4], %s257
          %s259 = sand.u32 %s29, 1
          %s260 = smul.addr %s259, 56
          %s261 = scalar_lea.vmem [#allocation3], %s260
          %s262 = smul.u32 2, %s19
          %s264 = ssub.s32 896, 896
          %265 = vsyncadd %s258, %s264
          %s266 = smul.addr %s262, 7
          %s267 = smul.addr %s266, 64
          %s268 = scalar_lea.hbm %s0, %s267
          %s269 = sshll.u32 %s261, 4
          %s270 = int_to_ptr.vmem [resolvable:$true] %s269
          %275 = dma.hbm_to_vmem [thread:$0]  %s268, 896, %s270, %s258, 448, 448, 28
        $region44: #{tpu_custom_call.1} parent=39 // pred_fallthru
          _
      $region40: #{tpu_custom_call.1} parent=5 // pred_fallthru
        _
      %p276 = scmp.le.s32.totalorder 1, %s19
      %p277 = scmp.lt.s32.totalorder %s19, 4
      %p278 = pnand %p276, %p277
      %p279 = pneg %p278
      // Predicated region
      $region45: #{tpu_custom_call.1} parent=5 // pred_check
        _
      $region46: #{tpu_custom_call.1} parent=5 // pred_check_branch
        %281 = sbr.rel (%p278) target = $region48
      $region47: #{tpu_custom_call.1} parent=5 // pred_region
        %s282 = ssub.s32 %s19, 1
        %s283 = sand.u32 %s32, 1
        %s284 = scalar_lea.sflag [#allocation4], %s283
        %s285 = sand.u32 %s32, 1
        %s286 = smul.addr %s285, 56
        %s287 = scalar_lea.vmem [#allocation3], %s286
        // Predicated region
        $region49: #{tpu_custom_call.1} parent=47 // pred_check
          %p288 = pneg %p45
        $region50: #{tpu_custom_call.1} parent=47 // pred_check_branch
          %290 = sbr.rel (%p288) target = $region52
        $region51: #{tpu_custom_call.1} parent=47 // pred_region
          %291 = dma.done %s284, 896
        $region52: #{tpu_custom_call.1} parent=47 // pred_fallthru
          _
        // Predicated region
        $region53: #{tpu_custom_call.1} parent=47 // pred_check
          %p292 = pneg %p66
        $region54: #{tpu_custom_call.1} parent=47 // pred_check_branch
          %294 = sbr.rel (%p292) target = $region56
        $region55: #{tpu_custom_call.1} parent=47 // pred_region
          %295 = dma.done [#allocation6], 25088
        $region56: #{tpu_custom_call.1} parent=47 // pred_fallthru
          _
        // Predicated region
        $region57: #{tpu_custom_call.1} parent=47 // pred_check
          %p296 = pneg %p108
        $region58: #{tpu_custom_call.1} parent=47 // pred_check_branch
          %298 = sbr.rel (%p296) target = $region60
        $region59: #{tpu_custom_call.1} parent=47 // pred_region
          %299 = dma.done [#allocation6], 8192
        $region60: #{tpu_custom_call.1} parent=47 // pred_fallthru
          _
        %s300 = sand.u32 %s32, 1
        %s301 = scalar_lea.sflag [#allocation4], %s300
        %s302 = sand.u32 %s32, 1
        %s303 = smul.addr %s302, 56
        %s304 = scalar_lea.vmem [#allocation3], %s303
        %p305 = pneg %p45
        %p306 = pneg %p42
        %p307 = pneg %p66
        %p308 = pneg %p63
        %p309 = pneg %p87
        %p310 = pneg %p84
        %p311 = pneg %p108
        %p312 = pneg %p105
        %p313 = pneg %p129
        %p314 = pneg %p126
        %p315 = pneg %p150
        %p316 = pneg %p147
        %p317 = pneg %p171
        %p318 = pneg %p168
        %p319 = pneg %p197
        %p320 = pneg %p194
        %s321 = smul.u32 2, %s24
        %p322 = scmp.lt.s32.totalorder %s321, 5
        %s323 = scalar_select %p322, %s321, 5
        %s324 = smul.addr %s323, 8
        %s325 = scalar_lea.vmem %s7, %s324
        %s326 = smul.u32 2, %s24
        %s327 = smul.u32 2, %s24
        %p328 = scmp.lt.s32.totalorder %s327, 5
        %s329 = scalar_select %p328, %s327, 5
        %s330 = smul.addr %s329, 8
        %s331 = scalar_lea.vmem %s7, %s330
        %s332 = smul.u32 2, %s24
        %v334 = vld [vmem:[%s287] sm:$0xff]
        %v335 = vld [vmem:[%s287 + $0x8] sm:$0xff]
        %v336 = vld [vmem:[%s287 + $0x10] sm:$0xff]
        %v337 = vld [vmem:[%s287 + $0x18] sm:$0xf]
        %v338 = vld [vmem:[%s287 + $0x1c] sm:$0xff]
        %v339 = vld [vmem:[%s287 + $0x24] sm:$0xff]
        %v340 = vld [vmem:[%s287 + $0x2c] sm:$0xff]
        %v341 = vld [vmem:[%s287 + $0x34] sm:$0xf]
        %v342 = vld [vmem:[#allocation5] sm:$0xff]
        %v343 = vld [vmem:[#allocation5 + $0x8] sm:$0xff]
        %v344 = vld [vmem:[#allocation5 + $0x10] sm:$0xff]
        %v345 = vld [vmem:[#allocation5 + $0x18] sm:$0xff]
        %v346 = vld [vmem:[#allocation5 + $0x20] sm:$0xff]
        %v347 = vld [vmem:[#allocation5 + $0x28] sm:$0xff]
        %v348 = vld [vmem:[#allocation5 + $0x30] sm:$0xff]
        %v349 = vld [vmem:[#allocation5 + $0x38] sm:$0xff]
        %v350 = vld [vmem:[#allocation5 + $0x40] sm:$0xff]
        %v351 = vld [vmem:[#allocation5 + $0x48] sm:$0xff]
        %v352 = vld [vmem:[#allocation5 + $0x50] sm:$0xff]
        %v353 = vld [vmem:[#allocation5 + $0x58] sm:$0xff]
        %v354 = vld [vmem:[#allocation5 + $0x60] sm:$0xff]
        %v355 = vld [vmem:[#allocation5 + $0x68] sm:$0xff]
        %v356 = vld [vmem:[#allocation5 + $0x70] sm:$0xff]
        %v357 = vld [vmem:[#allocation5 + $0x78] sm:$0xff]
        %v358 = vld [vmem:[#allocation5 + $0x80] sm:$0xff]
        %v359 = vld [vmem:[#allocation5 + $0x88] sm:$0xff]
        %v360 = vld [vmem:[#allocation5 + $0x90] sm:$0xff]
        %v361 = vld [vmem:[#allocation5 + $0x98] sm:$0xff]
        %v362 = vld [vmem:[#allocation5 + $0xa0] sm:$0xff]
        %v363 = vld [vmem:[#allocation5 + $0xa8] sm:$0xff]
        %v364 = vld [vmem:[#allocation5 + $0xb0] sm:$0xff]
        %v365 = vld [vmem:[#allocation5 + $0xb8] sm:$0xff]
        %v366 = vld [vmem:[#allocation5 + $0xc0] sm:$0xff]
        %v367 = vld [vmem:[#allocation5 + $0xc8] sm:$0xff]
        %v368 = vld [vmem:[#allocation5 + $0xd0] sm:$0xff]
        %v369 = vld [vmem:[#allocation5 + $0xd8] sm:$0xff]
        %v370 = vld [vmem:[#allocation5 + $0xe0] sm:$0xff]
        %v371 = vld [vmem:[#allocation5 + $0xe8] sm:$0xff]
        %v372 = vld [vmem:[#allocation5 + $0xf0] sm:$0xff]
        %v373 = vld [vmem:[#allocation5 + $0xf8] sm:$0xff]
        %v374 = vld [vmem:[#allocation5 + $0x100] sm:$0xff]
        %v375 = vld [vmem:[#allocation5 + $0x108] sm:$0xff]
        %v376 = vld [vmem:[#allocation5 + $0x110] sm:$0xff]
        %v377 = vld [vmem:[#allocation5 + $0x118] sm:$0xff]
        %v378 = vld [vmem:[#allocation5 + $0x120] sm:$0xff]
        %v379 = vld [vmem:[#allocation5 + $0x128] sm:$0xff]
        %v380 = vld [vmem:[#allocation5 + $0x130] sm:$0xff]
        %v381 = vld [vmem:[#allocation5 + $0x138] sm:$0xff]
        %v382 = vld [vmem:[#allocation5 + $0x140] sm:$0xff]
        %v383 = vld [vmem:[#allocation5 + $0x148] sm:$0xff]
        %v384 = vld [vmem:[#allocation5 + $0x150] sm:$0xff]
        %v385 = vld [vmem:[#allocation5 + $0x158] sm:$0xff]
        %v386 = vld [vmem:[#allocation5 + $0x160] sm:$0xff]
        %v387 = vld [vmem:[#allocation5 + $0x168] sm:$0xff]
        %v388 = vld [vmem:[#allocation5 + $0x170] sm:$0xff]
        %v389 = vld [vmem:[#allocation5 + $0x178] sm:$0xff]
        %v390 = vld [vmem:[#allocation5 + $0x180] sm:$0xff]
        %v391 = vld [vmem:[#allocation5 + $0x188] sm:$0xff]
        %v392 = vld [vmem:[#allocation5 + $0x190] sm:$0xff]
        %v393 = vld [vmem:[#allocation5 + $0x198] sm:$0xff]
        %v394 = vld [vmem:[#allocation5 + $0x1a0] sm:$0xff]
        %v395 = vld [vmem:[#allocation5 + $0x1a8] sm:$0xff]
        %v396 = vld [vmem:[#allocation5 + $0x1b0] sm:$0xff]
        %v397 = vld [vmem:[#allocation5 + $0x1b8] sm:$0xff]
        %v398 = vld [vmem:[#allocation5 + $0x1c0] sm:$0xff]
        %v399 = vld [vmem:[#allocation5 + $0x1c8] sm:$0xff]
        %v400 = vld [vmem:[#allocation5 + $0x1d0] sm:$0xff]
        %v401 = vld [vmem:[#allocation5 + $0x1d8] sm:$0xff]
        %v402 = vld [vmem:[#allocation5 + $0x1e0] sm:$0xff]
        %v403 = vld [vmem:[#allocation5 + $0x1e8] sm:$0xff]
        %v404 = vld [vmem:[#allocation5 + $0x1f0] sm:$0xff]
        %v405 = vld [vmem:[#allocation5 + $0x1f8] sm:$0xff]
        %v406 = vld [vmem:[#allocation5 + $0x200] sm:$0xff]
        %v407 = vld [vmem:[#allocation5 + $0x208] sm:$0xff]
        %v408 = vld [vmem:[#allocation5 + $0x210] sm:$0xff]
        %v409 = vld [vmem:[#allocation5 + $0x218] sm:$0xff]
        %v410 = vld [vmem:[#allocation5 + $0x220] sm:$0xff]
        %v411 = vld [vmem:[#allocation5 + $0x228] sm:$0xff]
        %v412 = vld [vmem:[#allocation5 + $0x230] sm:$0xff]
        %v413 = vld [vmem:[#allocation5 + $0x238] sm:$0xff]
        %v414 = vld [vmem:[#allocation5 + $0x240] sm:$0xff]
        %v415 = vld [vmem:[#allocation5 + $0x248] sm:$0xff]
        %v416 = vld [vmem:[#allocation5 + $0x250] sm:$0xff]
        %v417 = vld [vmem:[#allocation5 + $0x258] sm:$0xff]
        %v418 = vld [vmem:[#allocation5 + $0x260] sm:$0xff]
        %v419 = vld [vmem:[#allocation5 + $0x268] sm:$0xff]
        %v420 = vld [vmem:[#allocation5 + $0x270] sm:$0xff]
        %v421 = vld [vmem:[#allocation5 + $0x278] sm:$0xff]
        %v422 = vld [vmem:[#allocation5 + $0x280] sm:$0xff]
        %v423 = vld [vmem:[#allocation5 + $0x288] sm:$0xff]
        %v424 = vld [vmem:[#allocation5 + $0x290] sm:$0xff]
        %v425 = vld [vmem:[#allocation5 + $0x298] sm:$0xff]
        %v426 = vld [vmem:[#allocation5 + $0x2a0] sm:$0xff]
        %v427 = vld [vmem:[#allocation5 + $0x2a8] sm:$0xff]
        %v428 = vld [vmem:[#allocation5 + $0x2b0] sm:$0xff]
        %v429 = vld [vmem:[#allocation5 + $0x2b8] sm:$0xff]
        %v430 = vld [vmem:[#allocation5 + $0x2c0] sm:$0xff]
        %v431 = vld [vmem:[#allocation5 + $0x2c8] sm:$0xff]
        %v432 = vld [vmem:[#allocation5 + $0x2d0] sm:$0xff]
        %v433 = vld [vmem:[#allocation5 + $0x2d8] sm:$0xff]
        %v434 = vld [vmem:[#allocation5 + $0x2e0] sm:$0xff]
        %v435 = vld [vmem:[#allocation5 + $0x2e8] sm:$0xff]
        %v436 = vld [vmem:[#allocation5 + $0x2f0] sm:$0xff]
        %v437 = vld [vmem:[#allocation5 + $0x2f8] sm:$0xff]
        %v438 = vld [vmem:[#allocation5 + $0x300] sm:$0xff]
        %v439 = vld [vmem:[#allocation5 + $0x308] sm:$0xff]
        %v440 = vld [vmem:[#allocation5 + $0x310] sm:$0xff]
        %v441 = vld [vmem:[#allocation5 + $0x318] sm:$0xff]
        %v442 = vld [vmem:[#allocation5 + $0x320] sm:$0xff]
        %v443 = vld [vmem:[#allocation5 + $0x328] sm:$0xff]
        %v444 = vld [vmem:[#allocation5 + $0x330] sm:$0xff]
        %v445 = vld [vmem:[#allocation5 + $0x338] sm:$0xff]
        %v446 = vld [vmem:[#allocation5 + $0x340] sm:$0xff]
        %v447 = vld [vmem:[#allocation5 + $0x348] sm:$0xff]
        %v448 = vld [vmem:[#allocation5 + $0x350] sm:$0xff]
        %v449 = vld [vmem:[#allocation5 + $0x358] sm:$0xff]
        %v450 = vld [vmem:[#allocation5 + $0x360] sm:$0xff]
        %v451 = vld [vmem:[#allocation5 + $0x368] sm:$0xff]
        %v452 = vld [vmem:[#allocation5 + $0x370] sm:$0xff]
        %v453 = vld [vmem:[#allocation5 + $0x378] sm:$0xff]
        %v454 = vld [vmem:[#allocation5 + $0x380] sm:$0xff]
        %v455 = vld [vmem:[#allocation5 + $0x388] sm:$0xff]
        %v456 = vld [vmem:[#allocation5 + $0x390] sm:$0xff]
        %v457 = vld [vmem:[#allocation5 + $0x398] sm:$0xff]
        %v458 = vld [vmem:[#allocation5 + $0x3a0] sm:$0xff]
        %v459 = vld [vmem:[#allocation5 + $0x3a8] sm:$0xff]
        %v460 = vld [vmem:[#allocation5 + $0x3b0] sm:$0xff]
        %v461 = vld [vmem:[#allocation5 + $0x3b8] sm:$0xff]
        %v462 = vld [vmem:[#allocation5 + $0x3c0] sm:$0xff]
        %v463 = vld [vmem:[#allocation5 + $0x3c8] sm:$0xff]
        %v464 = vld [vmem:[#allocation5 + $0x3d0] sm:$0xff]
        %v465 = vld [vmem:[#allocation5 + $0x3d8] sm:$0xff]
        %v466 = vld [vmem:[#allocation5 + $0x3e0] sm:$0xff]
        %v467 = vld [vmem:[#allocation5 + $0x3e8] sm:$0xff]
        %v468 = vld [vmem:[#allocation5 + $0x3f0] sm:$0xff]
        %v469 = vld [vmem:[#allocation5 + $0x3f8] sm:$0xff]
        %v470 = vld [vmem:[#allocation5 + $0x400] sm:$0xff]
        %v471 = vld [vmem:[#allocation5 + $0x408] sm:$0xff]
        %v472 = vld [vmem:[#allocation5 + $0x410] sm:$0xff]
        %v473 = vld [vmem:[#allocation5 + $0x418] sm:$0xff]
        %v474 = vld [vmem:[#allocation5 + $0x420] sm:$0xff]
        %v475 = vld [vmem:[#allocation5 + $0x428] sm:$0xff]
        %v476 = vld [vmem:[#allocation5 + $0x430] sm:$0xff]
        %v477 = vld [vmem:[#allocation5 + $0x438] sm:$0xff]
        %v478 = vld [vmem:[#allocation5 + $0x440] sm:$0xff]
        %v479 = vld [vmem:[#allocation5 + $0x448] sm:$0xff]
        %v480 = vld [vmem:[#allocation5 + $0x450] sm:$0xff]
        %v481 = vld [vmem:[#allocation5 + $0x458] sm:$0xff]
        %v482 = vld [vmem:[#allocation5 + $0x460] sm:$0xff]
        %v483 = vld [vmem:[#allocation5 + $0x468] sm:$0xff]
        %v484 = vld [vmem:[#allocation5 + $0x470] sm:$0xff]
        %v485 = vld [vmem:[#allocation5 + $0x478] sm:$0xff]
        %v486 = vld [vmem:[#allocation5 + $0x480] sm:$0xff]
        %v487 = vld [vmem:[#allocation5 + $0x488] sm:$0xff]
        %v488 = vld [vmem:[#allocation5 + $0x490] sm:$0xff]
        %v489 = vld [vmem:[#allocation5 + $0x498] sm:$0xff]
        %v490 = vld [vmem:[#allocation5 + $0x4a0] sm:$0xff]
        %v491 = vld [vmem:[#allocation5 + $0x4a8] sm:$0xff]
        %v492 = vld [vmem:[#allocation5 + $0x4b0] sm:$0xff]
        %v493 = vld [vmem:[#allocation5 + $0x4b8] sm:$0xff]
        %v494 = vld [vmem:[#allocation5 + $0x4c0] sm:$0xff]
        %v495 = vld [vmem:[#allocation5 + $0x4c8] sm:$0xff]
        %v496 = vld [vmem:[#allocation5 + $0x4d0] sm:$0xff]
        %v497 = vld [vmem:[#allocation5 + $0x4d8] sm:$0xff]
        %v498 = vld [vmem:[#allocation5 + $0x4e0] sm:$0xff]
        %v499 = vld [vmem:[#allocation5 + $0x4e8] sm:$0xff]
        %v500 = vld [vmem:[#allocation5 + $0x4f0] sm:$0xff]
        %v501 = vld [vmem:[#allocation5 + $0x4f8] sm:$0xff]
        %v502 = vld [vmem:[#allocation5 + $0x500] sm:$0xff]
        %v503 = vld [vmem:[#allocation5 + $0x508] sm:$0xff]
        %v504 = vld [vmem:[#allocation5 + $0x510] sm:$0xff]
        %v505 = vld [vmem:[#allocation5 + $0x518] sm:$0xff]
        %v506 = vld [vmem:[#allocation5 + $0x520] sm:$0xff]
        %v507 = vld [vmem:[#allocation5 + $0x528] sm:$0xff]
        %v508 = vld [vmem:[#allocation5 + $0x530] sm:$0xff]
        %v509 = vld [vmem:[#allocation5 + $0x538] sm:$0xff]
        %v510 = vld [vmem:[#allocation5 + $0x540] sm:$0xff]
        %v511 = vld [vmem:[#allocation5 + $0x548] sm:$0xff]
        %v512 = vld [vmem:[#allocation5 + $0x550] sm:$0xff]
        %v513 = vld [vmem:[#allocation5 + $0x558] sm:$0xff]
        %v514 = vld [vmem:[#allocation5 + $0x560] sm:$0xff]
        %v515 = vld [vmem:[#allocation5 + $0x568] sm:$0xff]
        %v516 = vld [vmem:[#allocation5 + $0x570] sm:$0xff]
        %v517 = vld [vmem:[#allocation5 + $0x578] sm:$0xff]
        %v518 = vld [vmem:[#allocation5 + $0x580] sm:$0xff]
        %v519 = vld [vmem:[#allocation5 + $0x588] sm:$0xff]
        %v520 = vld [vmem:[#allocation5 + $0x590] sm:$0xff]
        %v521 = vld [vmem:[#allocation5 + $0x598] sm:$0xff]
        %v522 = vld [vmem:[#allocation5 + $0x5a0] sm:$0xff]
        %v523 = vld [vmem:[#allocation5 + $0x5a8] sm:$0xff]
        %v524 = vld [vmem:[#allocation5 + $0x5b0] sm:$0xff]
        %v525 = vld [vmem:[#allocation5 + $0x5b8] sm:$0xff]
        %v526 = vld [vmem:[#allocation5 + $0x5c0] sm:$0xff]
        %v527 = vld [vmem:[#allocation5 + $0x5c8] sm:$0xff]
        %v528 = vld [vmem:[#allocation5 + $0x5d0] sm:$0xff]
        %v529 = vld [vmem:[#allocation5 + $0x5d8] sm:$0xff]
        %v530 = vld [vmem:[#allocation5 + $0x5e0] sm:$0xff]
        %v531 = vld [vmem:[#allocation5 + $0x5e8] sm:$0xff]
        %v532 = vld [vmem:[#allocation5 + $0x5f0] sm:$0xff]
        %v533 = vld [vmem:[#allocation5 + $0x5f8] sm:$0xff]
        %v534 = vld [vmem:[#allocation5 + $0x600] sm:$0xff]
        %v535 = vld [vmem:[#allocation5 + $0x608] sm:$0xff]
        %v536 = vld [vmem:[#allocation5 + $0x610] sm:$0xff]
        %v537 = vld [vmem:[#allocation5 + $0x618] sm:$0xff]
        %v538 = vld [vmem:[%s2] sm:$0xf]
        %v540 = vlaneseq
        %v541 = vshrl.u32 %v540, 7
        %v542 = vsub.s32 0, %v541
        %v543 = vrot.slane %v538, %v542
        %v544 = vlaneseq
        %v545 = vshrl.u32 %v544, 7
        %v546 = vsub.s32 1, %v545
        %v547 = vrot.slane %v538, %v546
        %v548 = vlaneseq
        %v549 = vshrl.u32 %v548, 7
        %v550 = vsub.s32 2, %v549
        %v551 = vrot.slane %v538, %v550
        %v552 = vlaneseq
        %v553 = vshrl.u32 %v552, 7
        %v554 = vsub.s32 3, %v553
        %v555 = vrot.slane %v538, %v554
        %v568 = vunpack.c.l.b16 %v334
        %v569 = vunpack.c.h.b16 %v334
        %v570 = vunpack.c.l.b16 %v335
        %v571 = vunpack.c.h.b16 %v335
        %v572 = vunpack.c.l.b16 %v336
        %v573 = vunpack.c.h.b16 %v336
        %v574 = vunpack.c.l.b16 %v337
        %v575 = vunpack.c.l.b16 %v338
        %v576 = vunpack.c.h.b16 %v338
        %v577 = vunpack.c.l.b16 %v339
        %v578 = vunpack.c.h.b16 %v339
        %v579 = vunpack.c.l.b16 %v340
        %v580 = vunpack.c.h.b16 %v340
        %v581 = vunpack.c.l.b16 %v341
        %v582 = vpack.c.b16 %v575, %v568
        %v583 = vpack.c.b16 %v576, %v569
        %v584 = vpack.c.b16 %v577, %v570
        %v585 = vpack.c.b16 %v578, %v571
        %v586 = vpack.c.b16 %v579, %v572
        %v587 = vpack.c.b16 %v580, %v573
        %v588 = vpack.c.b16 %v581, %v574
        %v791 = vunpack.c.l.b16 %v342
        %v792 = vunpack.c.h.b16 %v342
        %v793 = vunpack.c.l.b16 %v343
        %v794 = vunpack.c.h.b16 %v343
        %v795 = vunpack.c.l.b16 %v344
        %v796 = vunpack.c.h.b16 %v344
        %v797 = vunpack.c.l.b16 %v345
        %v798 = vunpack.c.h.b16 %v345
        %v799 = vunpack.c.l.b16 %v346
        %v800 = vunpack.c.h.b16 %v346
        %v801 = vunpack.c.l.b16 %v347
        %v802 = vunpack.c.h.b16 %v347
        %v803 = vunpack.c.l.b16 %v348
        %v804 = vunpack.c.h.b16 %v348
        %v805 = vunpack.c.l.b16 %v349
        %v806 = vunpack.c.h.b16 %v349
        %v807 = vunpack.c.l.b16 %v350
        %v808 = vunpack.c.h.b16 %v350
        %v809 = vunpack.c.l.b16 %v351
        %v810 = vunpack.c.h.b16 %v351
        %v811 = vunpack.c.l.b16 %v352
        %v812 = vunpack.c.h.b16 %v352
        %v813 = vunpack.c.l.b16 %v353
        %v814 = vunpack.c.h.b16 %v353
        %v815 = vunpack.c.l.b16 %v354
        %v816 = vunpack.c.h.b16 %v354
        %v817 = vunpack.c.l.b16 %v355
        %v818 = vunpack.c.h.b16 %v355
        %v819 = vunpack.c.l.b16 %v356
        %v820 = vunpack.c.h.b16 %v356
        %v821 = vunpack.c.l.b16 %v357
        %v822 = vunpack.c.h.b16 %v357
        %v823 = vunpack.c.l.b16 %v358
        %v824 = vunpack.c.h.b16 %v358
        %v825 = vunpack.c.l.b16 %v359
        %v826 = vunpack.c.h.b16 %v359
        %v827 = vunpack.c.l.b16 %v360
        %v828 = vunpack.c.h.b16 %v360
        %v829 = vunpack.c.l.b16 %v361
        %v830 = vunpack.c.h.b16 %v361
        %v831 = vunpack.c.l.b16 %v362
        %v832 = vunpack.c.h.b16 %v362
        %v833 = vunpack.c.l.b16 %v363
        %v834 = vunpack.c.h.b16 %v363
        %v835 = vunpack.c.l.b16 %v364
        %v836 = vunpack.c.h.b16 %v364
        %v837 = vunpack.c.l.b16 %v365
        %v838 = vunpack.c.h.b16 %v365
        %v839 = vunpack.c.l.b16 %v366
        %v840 = vunpack.c.h.b16 %v366
        %v841 = vunpack.c.l.b16 %v367
        %v842 = vunpack.c.h.b16 %v367
        %v843 = vunpack.c.l.b16 %v368
        %v844 = vunpack.c.h.b16 %v368
        %v845 = vunpack.c.l.b16 %v369
        %v846 = vunpack.c.h.b16 %v369
        %v847 = vunpack.c.l.b16 %v370
        %v848 = vunpack.c.h.b16 %v370
        %v849 = vunpack.c.l.b16 %v371
        %v850 = vunpack.c.h.b16 %v371
        %v851 = vunpack.c.l.b16 %v372
        %v852 = vunpack.c.h.b16 %v372
        %v853 = vunpack.c.l.b16 %v373
        %v854 = vunpack.c.h.b16 %v373
        %v855 = vunpack.c.l.b16 %v374
        %v856 = vunpack.c.h.b16 %v374
        %v857 = vunpack.c.l.b16 %v375
        %v858 = vunpack.c.h.b16 %v375
        %v859 = vunpack.c.l.b16 %v376
        %v860 = vunpack.c.h.b16 %v376
        %v861 = vunpack.c.l.b16 %v377
        %v862 = vunpack.c.h.b16 %v377
        %v863 = vunpack.c.l.b16 %v378
        %v864 = vunpack.c.h.b16 %v378
        %v865 = vunpack.c.l.b16 %v379
        %v866 = vunpack.c.h.b16 %v379
        %v867 = vunpack.c.l.b16 %v380
        %v868 = vunpack.c.h.b16 %v380
        %v869 = vunpack.c.l.b16 %v381
        %v870 = vunpack.c.h.b16 %v381
        %v871 = vunpack.c.l.b16 %v382
        %v872 = vunpack.c.h.b16 %v382
        %v873 = vunpack.c.l.b16 %v383
        %v874 = vunpack.c.h.b16 %v383
        %v875 = vunpack.c.l.b16 %v384
        %v876 = vunpack.c.h.b16 %v384
        %v877 = vunpack.c.l.b16 %v385
        %v878 = vunpack.c.h.b16 %v385
        %v879 = vunpack.c.l.b16 %v386
        %v880 = vunpack.c.h.b16 %v386
        %v881 = vunpack.c.l.b16 %v387
        %v882 = vunpack.c.h.b16 %v387
        %v883 = vunpack.c.l.b16 %v388
        %v884 = vunpack.c.h.b16 %v388
        %v885 = vunpack.c.l.b16 %v389
        %v886 = vunpack.c.h.b16 %v389
        %v887 = vunpack.c.l.b16 %v390
        %v888 = vunpack.c.h.b16 %v390
        %v889 = vunpack.c.l.b16 %v391
        %v890 = vunpack.c.h.b16 %v391
        %v891 = vunpack.c.l.b16 %v392
        %v892 = vunpack.c.h.b16 %v392
        %v893 = vunpack.c.l.b16 %v393
        %v894 = vunpack.c.h.b16 %v393
        %v895 = vunpack.c.l.b16 %v394
        %v896 = vunpack.c.h.b16 %v394
        %v897 = vunpack.c.l.b16 %v395
        %v898 = vunpack.c.h.b16 %v395
        %v899 = vunpack.c.l.b16 %v396
        %v900 = vunpack.c.h.b16 %v396
        %v901 = vunpack.c.l.b16 %v397
        %v902 = vunpack.c.h.b16 %v397
        %v903 = vunpack.c.l.b16 %v398
        %v904 = vunpack.c.h.b16 %v398
        %v905 = vunpack.c.l.b16 %v399
        %v906 = vunpack.c.h.b16 %v399
        %v907 = vunpack.c.l.b16 %v400
        %v908 = vunpack.c.h.b16 %v400
        %v909 = vunpack.c.l.b16 %v401
        %v910 = vunpack.c.h.b16 %v401
        %v911 = vunpack.c.l.b16 %v402
        %v912 = vunpack.c.h.b16 %v402
        %v913 = vunpack.c.l.b16 %v403
        %v914 = vunpack.c.h.b16 %v403
        %v915 = vunpack.c.l.b16 %v404
        %v916 = vunpack.c.h.b16 %v404
        %v917 = vunpack.c.l.b16 %v405
        %v918 = vunpack.c.h.b16 %v405
        %v919 = vunpack.c.l.b16 %v406
        %v920 = vunpack.c.h.b16 %v406
        %v921 = vunpack.c.l.b16 %v407
        %v922 = vunpack.c.h.b16 %v407
        %v923 = vunpack.c.l.b16 %v408
        %v924 = vunpack.c.h.b16 %v408
        %v925 = vunpack.c.l.b16 %v409
        %v926 = vunpack.c.h.b16 %v409
        %v927 = vunpack.c.l.b16 %v410
        %v928 = vunpack.c.h.b16 %v410
        %v929 = vunpack.c.l.b16 %v411
        %v930 = vunpack.c.h.b16 %v411
        %v931 = vunpack.c.l.b16 %v412
        %v932 = vunpack.c.h.b16 %v412
        %v933 = vunpack.c.l.b16 %v413
        %v934 = vunpack.c.h.b16 %v413
        %v935 = vunpack.c.l.b16 %v414
        %v936 = vunpack.c.h.b16 %v414
        %v937 = vunpack.c.l.b16 %v415
        %v938 = vunpack.c.h.b16 %v415
        %v939 = vunpack.c.l.b16 %v416
        %v940 = vunpack.c.h.b16 %v416
        %v941 = vunpack.c.l.b16 %v417
        %v942 = vunpack.c.h.b16 %v417
        %v943 = vunpack.c.l.b16 %v418
        %v944 = vunpack.c.h.b16 %v418
        %v945 = vunpack.c.l.b16 %v419
        %v946 = vunpack.c.h.b16 %v419
        %v947 = vunpack.c.l.b16 %v420
        %v948 = vunpack.c.h.b16 %v420
        %v949 = vunpack.c.l.b16 %v421
        %v950 = vunpack.c.h.b16 %v421
        %v951 = vunpack.c.l.b16 %v422
        %v952 = vunpack.c.h.b16 %v422
        %v953 = vunpack.c.l.b16 %v423
        %v954 = vunpack.c.h.b16 %v423
        %v955 = vunpack.c.l.b16 %v424
        %v956 = vunpack.c.h.b16 %v424
        %v957 = vunpack.c.l.b16 %v425
        %v958 = vunpack.c.h.b16 %v425
        %v959 = vunpack.c.l.b16 %v426
        %v960 = vunpack.c.h.b16 %v426
        %v961 = vunpack.c.l.b16 %v427
        %v962 = vunpack.c.h.b16 %v427
        %v963 = vunpack.c.l.b16 %v428
        %v964 = vunpack.c.h.b16 %v428
        %v965 = vunpack.c.l.b16 %v429
        %v966 = vunpack.c.h.b16 %v429
        %v967 = vunpack.c.l.b16 %v430
        %v968 = vunpack.c.h.b16 %v430
        %v969 = vunpack.c.l.b16 %v431
        %v970 = vunpack.c.h.b16 %v431
        %v971 = vunpack.c.l.b16 %v432
        %v972 = vunpack.c.h.b16 %v432
        %v973 = vunpack.c.l.b16 %v433
        %v974 = vunpack.c.h.b16 %v433
        %v975 = vunpack.c.l.b16 %v434
        %v976 = vunpack.c.h.b16 %v434
        %v977 = vunpack.c.l.b16 %v435
        %v978 = vunpack.c.h.b16 %v435
        %v979 = vunpack.c.l.b16 %v436
        %v980 = vunpack.c.h.b16 %v436
        %v981 = vunpack.c.l.b16 %v437
        %v982 = vunpack.c.h.b16 %v437
        %v983 = vunpack.c.l.b16 %v438
        %v984 = vunpack.c.h.b16 %v438
        %v985 = vunpack.c.l.b16 %v439
        %v986 = vunpack.c.h.b16 %v439
        %v987 = vunpack.c.l.b16 %v440
        %v988 = vunpack.c.h.b16 %v440
        %v989 = vunpack.c.l.b16 %v441
        %v990 = vunpack.c.h.b16 %v441
        %v991 = vunpack.c.l.b16 %v442
        %v992 = vunpack.c.h.b16 %v442
        %v993 = vunpack.c.l.b16 %v443
        %v994 = vunpack.c.h.b16 %v443
        %v995 = vunpack.c.l.b16 %v444
        %v996 = vunpack.c.h.b16 %v444
        %v997 = vunpack.c.l.b16 %v445
        %v998 = vunpack.c.h.b16 %v445
        %v999 = vunpack.c.l.b16 %v446
        %v1000 = vunpack.c.h.b16 %v446
        %v1001 = vunpack.c.l.b16 %v447
        %v1002 = vunpack.c.h.b16 %v447
        %v1003 = vunpack.c.l.b16 %v448
        %v1004 = vunpack.c.h.b16 %v448
        %v1005 = vunpack.c.l.b16 %v449
        %v1006 = vunpack.c.h.b16 %v449
        %v1007 = vunpack.c.l.b16 %v450
        %v1008 = vunpack.c.h.b16 %v450
        %v1009 = vunpack.c.l.b16 %v451
        %v1010 = vunpack.c.h.b16 %v451
        %v1011 = vunpack.c.l.b16 %v452
        %v1012 = vunpack.c.h.b16 %v452
        %v1013 = vunpack.c.l.b16 %v453
        %v1014 = vunpack.c.h.b16 %v453
        %v1015 = vunpack.c.l.b16 %v454
        %v1016 = vunpack.c.h.b16 %v454
        %v1017 = vunpack.c.l.b16 %v455
        %v1018 = vunpack.c.h.b16 %v455
        %v1019 = vunpack.c.l.b16 %v456
        %v1020 = vunpack.c.h.b16 %v456
        %v1021 = vunpack.c.l.b16 %v457
        %v1022 = vunpack.c.h.b16 %v457
        %v1023 = vunpack.c.l.b16 %v458
        %v1024 = vunpack.c.h.b16 %v458
        %v1025 = vunpack.c.l.b16 %v459
        %v1026 = vunpack.c.h.b16 %v459
        %v1027 = vunpack.c.l.b16 %v460
        %v1028 = vunpack.c.h.b16 %v460
        %v1029 = vunpack.c.l.b16 %v461
        %v1030 = vunpack.c.h.b16 %v461
        %v1031 = vunpack.c.l.b16 %v462
        %v1032 = vunpack.c.h.b16 %v462
        %v1033 = vunpack.c.l.b16 %v463
        %v1034 = vunpack.c.h.b16 %v463
        %v1035 = vunpack.c.l.b16 %v464
        %v1036 = vunpack.c.h.b16 %v464
        %v1037 = vunpack.c.l.b16 %v465
        %v1038 = vunpack.c.h.b16 %v465
        %v1039 = vunpack.c.l.b16 %v466
        %v1040 = vunpack.c.h.b16 %v466
        %v1041 = vunpack.c.l.b16 %v467
        %v1042 = vunpack.c.h.b16 %v467
        %v1043 = vunpack.c.l.b16 %v468
        %v1044 = vunpack.c.h.b16 %v468
        %v1045 = vunpack.c.l.b16 %v469
        %v1046 = vunpack.c.h.b16 %v469
        %v1047 = vunpack.c.l.b16 %v470
        %v1048 = vunpack.c.h.b16 %v470
        %v1049 = vunpack.c.l.b16 %v471
        %v1050 = vunpack.c.h.b16 %v471
        %v1051 = vunpack.c.l.b16 %v472
        %v1052 = vunpack.c.h.b16 %v472
        %v1053 = vunpack.c.l.b16 %v473
        %v1054 = vunpack.c.h.b16 %v473
        %v1055 = vunpack.c.l.b16 %v474
        %v1056 = vunpack.c.h.b16 %v474
        %v1057 = vunpack.c.l.b16 %v475
        %v1058 = vunpack.c.h.b16 %v475
        %v1059 = vunpack.c.l.b16 %v476
        %v1060 = vunpack.c.h.b16 %v476
        %v1061 = vunpack.c.l.b16 %v477
        %v1062 = vunpack.c.h.b16 %v477
        %v1063 = vunpack.c.l.b16 %v478
        %v1064 = vunpack.c.h.b16 %v478
        %v1065 = vunpack.c.l.b16 %v479
        %v1066 = vunpack.c.h.b16 %v479
        %v1067 = vunpack.c.l.b16 %v480
        %v1068 = vunpack.c.h.b16 %v480
        %v1069 = vunpack.c.l.b16 %v481
        %v1070 = vunpack.c.h.b16 %v481
        %v1071 = vunpack.c.l.b16 %v482
        %v1072 = vunpack.c.h.b16 %v482
        %v1073 = vunpack.c.l.b16 %v483
        %v1074 = vunpack.c.h.b16 %v483
        %v1075 = vunpack.c.l.b16 %v484
        %v1076 = vunpack.c.h.b16 %v484
        %v1077 = vunpack.c.l.b16 %v485
        %v1078 = vunpack.c.h.b16 %v485
        %v1079 = vunpack.c.l.b16 %v486
        %v1080 = vunpack.c.h.b16 %v486
        %v1081 = vunpack.c.l.b16 %v487
        %v1082 = vunpack.c.h.b16 %v487
        %v1083 = vunpack.c.l.b16 %v488
        %v1084 = vunpack.c.h.b16 %v488
        %v1085 = vunpack.c.l.b16 %v489
        %v1086 = vunpack.c.h.b16 %v489
        %v1087 = vunpack.c.l.b16 %v490
        %v1088 = vunpack.c.h.b16 %v490
        %v1089 = vunpack.c.l.b16 %v491
        %v1090 = vunpack.c.h.b16 %v491
        %v1091 = vunpack.c.l.b16 %v492
        %v1092 = vunpack.c.h.b16 %v492
        %v1093 = vunpack.c.l.b16 %v493
        %v1094 = vunpack.c.h.b16 %v493
        %v1095 = vunpack.c.l.b16 %v494
        %v1096 = vunpack.c.h.b16 %v494
        %v1097 = vunpack.c.l.b16 %v495
        %v1098 = vunpack.c.h.b16 %v495
        %v1099 = vunpack.c.l.b16 %v496
        %v1100 = vunpack.c.h.b16 %v496
        %v1101 = vunpack.c.l.b16 %v497
        %v1102 = vunpack.c.h.b16 %v497
        %v1103 = vunpack.c.l.b16 %v498
        %v1104 = vunpack.c.h.b16 %v498
        %v1105 = vunpack.c.l.b16 %v499
        %v1106 = vunpack.c.h.b16 %v499
        %v1107 = vunpack.c.l.b16 %v500
        %v1108 = vunpack.c.h.b16 %v500
        %v1109 = vunpack.c.l.b16 %v501
        %v1110 = vunpack.c.h.b16 %v501
        %v1111 = vunpack.c.l.b16 %v502
        %v1112 = vunpack.c.h.b16 %v502
        %v1113 = vunpack.c.l.b16 %v503
        %v1114 = vunpack.c.h.b16 %v503
        %v1115 = vunpack.c.l.b16 %v504
        %v1116 = vunpack.c.h.b16 %v504
        %v1117 = vunpack.c.l.b16 %v505
        %v1118 = vunpack.c.h.b16 %v505
        %v1119 = vunpack.c.l.b16 %v506
        %v1120 = vunpack.c.h.b16 %v506
        %v1121 = vunpack.c.l.b16 %v507
        %v1122 = vunpack.c.h.b16 %v507
        %v1123 = vunpack.c.l.b16 %v508
        %v1124 = vunpack.c.h.b16 %v508
        %v1125 = vunpack.c.l.b16 %v509
        %v1126 = vunpack.c.h.b16 %v509
        %v1127 = vunpack.c.l.b16 %v510
        %v1128 = vunpack.c.h.b16 %v510
        %v1129 = vunpack.c.l.b16 %v511
        %v1130 = vunpack.c.h.b16 %v511
        %v1131 = vunpack.c.l.b16 %v512
        %v1132 = vunpack.c.h.b16 %v512
        %v1133 = vunpack.c.l.b16 %v513
        %v1134 = vunpack.c.h.b16 %v513
        %v1135 = vunpack.c.l.b16 %v514
        %v1136 = vunpack.c.h.b16 %v514
        %v1137 = vunpack.c.l.b16 %v515
        %v1138 = vunpack.c.h.b16 %v515
        %v1139 = vunpack.c.l.b16 %v516
        %v1140 = vunpack.c.h.b16 %v516
        %v1141 = vunpack.c.l.b16 %v517
        %v1142 = vunpack.c.h.b16 %v517
        %v1143 = vunpack.c.l.b16 %v518
        %v1144 = vunpack.c.h.b16 %v518
        %v1145 = vunpack.c.l.b16 %v519
        %v1146 = vunpack.c.h.b16 %v519
        %v1147 = vunpack.c.l.b16 %v520
        %v1148 = vunpack.c.h.b16 %v520
        %v1149 = vunpack.c.l.b16 %v521
        %v1150 = vunpack.c.h.b16 %v521
        %v1151 = vunpack.c.l.b16 %v522
        %v1152 = vunpack.c.h.b16 %v522
        %v1153 = vunpack.c.l.b16 %v523
        %v1154 = vunpack.c.h.b16 %v523
        %v1155 = vunpack.c.l.b16 %v524
        %v1156 = vunpack.c.h.b16 %v524
        %v1157 = vunpack.c.l.b16 %v525
        %v1158 = vunpack.c.h.b16 %v525
        %v1159 = vunpack.c.l.b16 %v526
        %v1160 = vunpack.c.h.b16 %v526
        %v1161 = vunpack.c.l.b16 %v527
        %v1162 = vunpack.c.h.b16 %v527
        %v1163 = vunpack.c.l.b16 %v528
        %v1164 = vunpack.c.h.b16 %v528
        %v1165 = vunpack.c.l.b16 %v529
        %v1166 = vunpack.c.h.b16 %v529
        %v1167 = vunpack.c.l.b16 %v530
        %v1168 = vunpack.c.h.b16 %v530
        %v1169 = vunpack.c.l.b16 %v531
        %v1170 = vunpack.c.h.b16 %v531
        %v1171 = vunpack.c.l.b16 %v532
        %v1172 = vunpack.c.h.b16 %v532
        %v1173 = vunpack.c.l.b16 %v533
        %v1174 = vunpack.c.h.b16 %v533
        %v1175 = vunpack.c.l.b16 %v534
        %v1176 = vunpack.c.h.b16 %v534
        %v1177 = vunpack.c.l.b16 %v535
        %v1178 = vunpack.c.h.b16 %v535
        %v1179 = vunpack.c.l.b16 %v536
        %v1180 = vunpack.c.h.b16 %v536
        %v1181 = vunpack.c.l.b16 %v537
        %v1182 = vunpack.c.h.b16 %v537
        %v1183 = vpack.c.b16 %v795, %v791
        %v1184 = vpack.c.b16 %v796, %v792
        %v1185 = vpack.c.b16 %v797, %v793
        %v1186 = vpack.c.b16 %v798, %v794
        %v1187 = vpack.c.b16 %v803, %v799
        %v1188 = vpack.c.b16 %v804, %v800
        %v1189 = vpack.c.b16 %v805, %v801
        %v1190 = vpack.c.b16 %v806, %v802
        %v1191 = vpack.c.b16 %v811, %v807
        %v1192 = vpack.c.b16 %v812, %v808
        %v1193 = vpack.c.b16 %v813, %v809
        %v1194 = vpack.c.b16 %v814, %v810
        %v1195 = vpack.c.b16 %v819, %v815
        %v1196 = vpack.c.b16 %v820, %v816
        %v1197 = vpack.c.b16 %v821, %v817
        %v1198 = vpack.c.b16 %v822, %v818
        %v1199 = vpack.c.b16 %v827, %v823
        %v1200 = vpack.c.b16 %v828, %v824
        %v1201 = vpack.c.b16 %v829, %v825
        %v1202 = vpack.c.b16 %v830, %v826
        %v1203 = vpack.c.b16 %v835, %v831
        %v1204 = vpack.c.b16 %v836, %v832
        %v1205 = vpack.c.b16 %v837, %v833
        %v1206 = vpack.c.b16 %v838, %v834
        %v1207 = vpack.c.b16 %v843, %v839
        %v1208 = vpack.c.b16 %v844, %v840
        %v1209 = vpack.c.b16 %v845, %v841
        %v1210 = vpack.c.b16 %v846, %v842
        %v1211 = vpack.c.b16 %v851, %v847
        %v1212 = vpack.c.b16 %v852, %v848
        %v1213 = vpack.c.b16 %v853, %v849
        %v1214 = vpack.c.b16 %v854, %v850
        %v1215 = vpack.c.b16 %v859, %v855
        %v1216 = vpack.c.b16 %v860, %v856
        %v1217 = vpack.c.b16 %v861, %v857
        %v1218 = vpack.c.b16 %v862, %v858
        %v1219 = vpack.c.b16 %v867, %v863
        %v1220 = vpack.c.b16 %v868, %v864
        %v1221 = vpack.c.b16 %v869, %v865
        %v1222 = vpack.c.b16 %v870, %v866
        %v1223 = vpack.c.b16 %v875, %v871
        %v1224 = vpack.c.b16 %v876, %v872
        %v1225 = vpack.c.b16 %v877, %v873
        %v1226 = vpack.c.b16 %v878, %v874
        %v1227 = vpack.c.b16 %v883, %v879
        %v1228 = vpack.c.b16 %v884, %v880
        %v1229 = vpack.c.b16 %v885, %v881
        %v1230 = vpack.c.b16 %v886, %v882
        %v1231 = vpack.c.b16 %v891, %v887
        %v1232 = vpack.c.b16 %v892, %v888
        %v1233 = vpack.c.b16 %v893, %v889
        %v1234 = vpack.c.b16 %v894, %v890
        %v1235 = vpack.c.b16 %v899, %v895
        %v1236 = vpack.c.b16 %v900, %v896
        %v1237 = vpack.c.b16 %v901, %v897
        %v1238 = vpack.c.b16 %v902, %v898
        %v1239 = vpack.c.b16 %v907, %v903
        %v1240 = vpack.c.b16 %v908, %v904
        %v1241 = vpack.c.b16 %v909, %v905
        %v1242 = vpack.c.b16 %v910, %v906
        %v1243 = vpack.c.b16 %v915, %v911
        %v1244 = vpack.c.b16 %v916, %v912
        %v1245 = vpack.c.b16 %v917, %v913
        %v1246 = vpack.c.b16 %v918, %v914
        %v1247 = vpack.c.b16 %v923, %v919
        %v1248 = vpack.c.b16 %v924, %v920
        %v1249 = vpack.c.b16 %v925, %v921
        %v1250 = vpack.c.b16 %v926, %v922
        %v1251 = vpack.c.b16 %v931, %v927
        %v1252 = vpack.c.b16 %v932, %v928
        %v1253 = vpack.c.b16 %v933, %v929
        %v1254 = vpack.c.b16 %v934, %v930
        %v1255 = vpack.c.b16 %v939, %v935
        %v1256 = vpack.c.b16 %v940, %v936
        %v1257 = vpack.c.b16 %v941, %v937
        %v1258 = vpack.c.b16 %v942, %v938
        %v1259 = vpack.c.b16 %v947, %v943
        %v1260 = vpack.c.b16 %v948, %v944
        %v1261 = vpack.c.b16 %v949, %v945
        %v1262 = vpack.c.b16 %v950, %v946
        %v1263 = vpack.c.b16 %v955, %v951
        %v1264 = vpack.c.b16 %v956, %v952
        %v1265 = vpack.c.b16 %v957, %v953
        %v1266 = vpack.c.b16 %v958, %v954
        %v1267 = vpack.c.b16 %v963, %v959
        %v1268 = vpack.c.b16 %v964, %v960
        %v1269 = vpack.c.b16 %v965, %v961
        %v1270 = vpack.c.b16 %v966, %v962
        %v1271 = vpack.c.b16 %v971, %v967
        %v1272 = vpack.c.b16 %v972, %v968
        %v1273 = vpack.c.b16 %v973, %v969
        %v1274 = vpack.c.b16 %v974, %v970
        %v1275 = vpack.c.b16 %v979, %v975
        %v1276 = vpack.c.b16 %v980, %v976
        %v1277 = vpack.c.b16 %v981, %v977
        %v1278 = vpack.c.b16 %v982, %v978
        %v1279 = vpack.c.b16 %v987, %v983
        %v1280 = vpack.c.b16 %v988, %v984
        %v1281 = vpack.c.b16 %v989, %v985
        %v1282 = vpack.c.b16 %v990, %v986
        %v1283 = vpack.c.b16 %v995, %v991
        %v1284 = vpack.c.b16 %v996, %v992
        %v1285 = vpack.c.b16 %v997, %v993
        %v1286 = vpack.c.b16 %v998, %v994
        %v1287 = vpack.c.b16 %v1003, %v999
        %v1288 = vpack.c.b16 %v1004, %v1000
        %v1289 = vpack.c.b16 %v1005, %v1001
        %v1290 = vpack.c.b16 %v1006, %v1002
        %v1291 = vpack.c.b16 %v1011, %v1007
        %v1292 = vpack.c.b16 %v1012, %v1008
        %v1293 = vpack.c.b16 %v1013, %v1009
        %v1294 = vpack.c.b16 %v1014, %v1010
        %v1295 = vpack.c.b16 %v1019, %v1015
        %v1296 = vpack.c.b16 %v1020, %v1016
        %v1297 = vpack.c.b16 %v1021, %v1017
        %v1298 = vpack.c.b16 %v1022, %v1018
        %v1299 = vpack.c.b16 %v1027, %v1023
        %v1300 = vpack.c.b16 %v1028, %v1024
        %v1301 = vpack.c.b16 %v1029, %v1025
        %v1302 = vpack.c.b16 %v1030, %v1026
        %v1303 = vpack.c.b16 %v1035, %v1031
        %v1304 = vpack.c.b16 %v1036, %v1032
        %v1305 = vpack.c.b16 %v1037, %v1033
        %v1306 = vpack.c.b16 %v1038, %v1034
        %v1307 = vpack.c.b16 %v1043, %v1039
        %v1308 = vpack.c.b16 %v1044, %v1040
        %v1309 = vpack.c.b16 %v1045, %v1041
        %v1310 = vpack.c.b16 %v1046, %v1042
        %v1311 = vpack.c.b16 %v1051, %v1047
        %v1312 = vpack.c.b16 %v1052, %v1048
        %v1313 = vpack.c.b16 %v1053, %v1049
        %v1314 = vpack.c.b16 %v1054, %v1050
        %v1315 = vpack.c.b16 %v1059, %v1055
        %v1316 = vpack.c.b16 %v1060, %v1056
        %v1317 = vpack.c.b16 %v1061, %v1057
        %v1318 = vpack.c.b16 %v1062, %v1058
        %v1319 = vpack.c.b16 %v1067, %v1063
        %v1320 = vpack.c.b16 %v1068, %v1064
        %v1321 = vpack.c.b16 %v1069, %v1065
        %v1322 = vpack.c.b16 %v1070, %v1066
        %v1323 = vpack.c.b16 %v1075, %v1071
        %v1324 = vpack.c.b16 %v1076, %v1072
        %v1325 = vpack.c.b16 %v1077, %v1073
        %v1326 = vpack.c.b16 %v1078, %v1074
        %v1327 = vpack.c.b16 %v1083, %v1079
        %v1328 = vpack.c.b16 %v1084, %v1080
        %v1329 = vpack.c.b16 %v1085, %v1081
        %v1330 = vpack.c.b16 %v1086, %v1082
        %v1331 = vpack.c.b16 %v1091, %v1087
        %v1332 = vpack.c.b16 %v1092, %v1088
        %v1333 = vpack.c.b16 %v1093, %v1089
        %v1334 = vpack.c.b16 %v1094, %v1090
        %v1335 = vpack.c.b16 %v1099, %v1095
        %v1336 = vpack.c.b16 %v1100, %v1096
        %v1337 = vpack.c.b16 %v1101, %v1097
        %v1338 = vpack.c.b16 %v1102, %v1098
        %v1339 = vpack.c.b16 %v1107, %v1103
        %v1340 = vpack.c.b16 %v1108, %v1104
        %v1341 = vpack.c.b16 %v1109, %v1105
        %v1342 = vpack.c.b16 %v1110, %v1106
        %v1343 = vpack.c.b16 %v1115, %v1111
        %v1344 = vpack.c.b16 %v1116, %v1112
        %v1345 = vpack.c.b16 %v1117, %v1113
        %v1346 = vpack.c.b16 %v1118, %v1114
        %v1347 = vpack.c.b16 %v1123, %v1119
        %v1348 = vpack.c.b16 %v1124, %v1120
        %v1349 = vpack.c.b16 %v1125, %v1121
        %v1350 = vpack.c.b16 %v1126, %v1122
        %v1351 = vpack.c.b16 %v1131, %v1127
        %v1352 = vpack.c.b16 %v1132, %v1128
        %v1353 = vpack.c.b16 %v1133, %v1129
        %v1354 = vpack.c.b16 %v1134, %v1130
        %v1355 = vpack.c.b16 %v1139, %v1135
        %v1356 = vpack.c.b16 %v1140, %v1136
        %v1357 = vpack.c.b16 %v1141, %v1137
        %v1358 = vpack.c.b16 %v1142, %v1138
        %v1359 = vpack.c.b16 %v1147, %v1143
        %v1360 = vpack.c.b16 %v1148, %v1144
        %v1361 = vpack.c.b16 %v1149, %v1145
        %v1362 = vpack.c.b16 %v1150, %v1146
        %v1363 = vpack.c.b16 %v1155, %v1151
        %v1364 = vpack.c.b16 %v1156, %v1152
        %v1365 = vpack.c.b16 %v1157, %v1153
        %v1366 = vpack.c.b16 %v1158, %v1154
        %v1367 = vpack.c.b16 %v1163, %v1159
        %v1368 = vpack.c.b16 %v1164, %v1160
        %v1369 = vpack.c.b16 %v1165, %v1161
        %v1370 = vpack.c.b16 %v1166, %v1162
        %v1371 = vpack.c.b16 %v1171, %v1167
        %v1372 = vpack.c.b16 %v1172, %v1168
        %v1373 = vpack.c.b16 %v1173, %v1169
        %v1374 = vpack.c.b16 %v1174, %v1170
        %v1375 = vpack.c.b16 %v1179, %v1175
        %v1376 = vpack.c.b16 %v1180, %v1176
        %v1377 = vpack.c.b16 %v1181, %v1177
        %v1378 = vpack.c.b16 %v1182, %v1178
        %vm1575 = vcmask 130048
        %v1577 = vsel %vm1575, %v588, 0
        %1579 = vmatprep.subr.bf16.mxu0 %v1184
        %1580 = vmatpush1.bf16.msra.mxu0 %v1183
        %1581 = vmatprep.subr.bf16.mxu0 %v1188
        %1582 = vmatpush1.bf16.msra.mxu0 %v1187
        %1583 = vmatprep.subr.bf16.mxu0 %v1192
        %1584 = vmatpush1.bf16.msra.mxu0 %v1191
        %1585 = vmatprep.subr.bf16.mxu0 %v1196
        %1586 = vmatpush1.bf16.msra.mxu0 %v1195
        %1587 = vmatprep.subr.bf16.mxu0 %v1200
        %1588 = vmatpush1.bf16.msra.mxu0 %v1199
        %1589 = vmatprep.subr.bf16.mxu0 %v1204
        %1590 = vmatpush1.bf16.msra.mxu0 %v1203
        %1591 = vmatprep.subr.bf16.mxu0 %v1208
        %1592 = vmatpush1.bf16.msra.mxu0 %v1207
        %1593 = vmatprep.subr.bf16.mxu0 %v1212
        %1594 = vmatpush1.bf16.msra.mxu0 %v1211
        %1595 = vmatprep.subr.bf16.mxu0 %v1216
        %1596 = vmatpush1.bf16.msra.mxu0 %v1215
        %1597 = vmatprep.subr.bf16.mxu0 %v1220
        %1598 = vmatpush1.bf16.msra.mxu0 %v1219
        %1599 = vmatprep.subr.bf16.mxu0 %v1224
        %1600 = vmatpush1.bf16.msra.mxu0 %v1223
        %1601 = vmatprep.subr.bf16.mxu0 %v1228
        %1602 = vmatpush1.bf16.msra.mxu0 %v1227
        %1603 = vmatprep.subr.bf16.mxu0 %v1232
        %1604 = vmatpush1.bf16.msra.mxu0 %v1231
        %1605 = vmatprep.subr.bf16.mxu0 %v1236
        %1606 = vmatpush1.bf16.msra.mxu0 %v1235
        %1607 = vmatprep.subr.bf16.mxu0 %v1240
        %1608 = vmatpush1.bf16.msra.mxu0 %v1239
        %1609 = vmatprep.subr.bf16.mxu0 %v1244
        %1610 = vmatpush1.bf16.msra.mxu0 %v1243
        %1611 = vmatprep.mubr.bf16.mxu0 %v583
        %1612 = vmatmul.mubr.bf16.gmra.mrb[0].mxu0 %v582
        %v1613 = vpop.f32.mrb[0].mxu0
        %v1614 = vadd.f32 %v543, %v1613
        %v1615 = vpop.f32.mrb[0].mxu0
        %v1616 = vadd.f32 %v547, %v1615
        %v1617 = vpop.f32.mrb[0].mxu0
        %v1618 = vadd.f32 %v543, %v1617
        %v1619 = vpop.f32.mrb[0].mxu0
        %v1620 = vadd.f32 %v547, %v1619
        %1621 = vdwg.mxu0
        %1622 = vmatprep.subr.bf16.mxu0 %v1248
        %1623 = vmatpush1.bf16.msra.mxu0 %v1247
        %1624 = vmatprep.subr.bf16.mxu0 %v1252
        %1625 = vmatpush1.bf16.msra.mxu0 %v1251
        %1626 = vmatprep.subr.bf16.mxu0 %v1256
        %1627 = vmatpush1.bf16.msra.mxu0 %v1255
        %1628 = vmatprep.subr.bf16.mxu0 %v1260
        %1629 = vmatpush1.bf16.msra.mxu0 %v1259
        %1630 = vmatprep.subr.bf16.mxu0 %v1264
        %1631 = vmatpush1.bf16.msra.mxu0 %v1263
        %1632 = vmatprep.subr.bf16.mxu0 %v1268
        %1633 = vmatpush1.bf16.msra.mxu0 %v1267
        %1634 = vmatprep.subr.bf16.mxu0 %v1272
        %1635 = vmatpush1.bf16.msra.mxu0 %v1271
        %1636 = vmatprep.subr.bf16.mxu0 %v1276
        %1637 = vmatpush1.bf16.msra.mxu0 %v1275
        %1638 = vmatprep.subr.bf16.mxu0 %v1280
        %1639 = vmatpush1.bf16.msra.mxu0 %v1279
        %1640 = vmatprep.subr.bf16.mxu0 %v1284
        %1641 = vmatpush1.bf16.msra.mxu0 %v1283
        %1642 = vmatprep.subr.bf16.mxu0 %v1288
        %1643 = vmatpush1.bf16.msra.mxu0 %v1287
        %1644 = vmatprep.subr.bf16.mxu0 %v1292
        %1645 = vmatpush1.bf16.msra.mxu0 %v1291
        %1646 = vmatprep.subr.bf16.mxu0 %v1296
        %1647 = vmatpush1.bf16.msra.mxu0 %v1295
        %1648 = vmatprep.subr.bf16.mxu0 %v1300
        %1649 = vmatpush1.bf16.msra.mxu0 %v1299
        %1650 = vmatprep.subr.bf16.mxu0 %v1304
        %1651 = vmatpush1.bf16.msra.mxu0 %v1303
        %1652 = vmatprep.subr.bf16.mxu0 %v1308
        %1653 = vmatpush1.bf16.msra.mxu0 %v1307
        %1654 = vmatprep.mubr.bf16.mxu0 %v585
        %1655 = vmatmul.mubr.bf16.gmra.mrb[0].mxu0 %v584
        %v1656 = vpop.f32.mrb[0].mxu0
        %v1657 = vadd.f32 %v1614, %v1656
        %v1658 = vpop.f32.mrb[0].mxu0
        %v1659 = vadd.f32 %v1616, %v1658
        %v1660 = vpop.f32.mrb[0].mxu0
        %v1661 = vadd.f32 %v1618, %v1660
        %v1662 = vpop.f32.mrb[0].mxu0
        %v1663 = vadd.f32 %v1620, %v1662
        %1664 = vdwg.mxu0
        %1665 = vmatprep.subr.bf16.mxu0 %v1312
        %1666 = vmatpush1.bf16.msra.mxu0 %v1311
        %1667 = vmatprep.subr.bf16.mxu0 %v1316
        %1668 = vmatpush1.bf16.msra.mxu0 %v1315
        %1669 = vmatprep.subr.bf16.mxu0 %v1320
        %1670 = vmatpush1.bf16.msra.mxu0 %v1319
        %1671 = vmatprep.subr.bf16.mxu0 %v1324
        %1672 = vmatpush1.bf16.msra.mxu0 %v1323
        %1673 = vmatprep.subr.bf16.mxu0 %v1328
        %1674 = vmatpush1.bf16.msra.mxu0 %v1327
        %1675 = vmatprep.subr.bf16.mxu0 %v1332
        %1676 = vmatpush1.bf16.msra.mxu0 %v1331
        %1677 = vmatprep.subr.bf16.mxu0 %v1336
        %1678 = vmatpush1.bf16.msra.mxu0 %v1335
        %1679 = vmatprep.subr.bf16.mxu0 %v1340
        %1680 = vmatpush1.bf16.msra.mxu0 %v1339
        %1681 = vmatprep.subr.bf16.mxu0 %v1344
        %1682 = vmatpush1.bf16.msra.mxu0 %v1343
        %1683 = vmatprep.subr.bf16.mxu0 %v1348
        %1684 = vmatpush1.bf16.msra.mxu0 %v1347
        %1685 = vmatprep.subr.bf16.mxu0 %v1352
        %1686 = vmatpush1.bf16.msra.mxu0 %v1351
        %1687 = vmatprep.subr.bf16.mxu0 %v1356
        %1688 = vmatpush1.bf16.msra.mxu0 %v1355
        %1689 = vmatprep.subr.bf16.mxu0 %v1360
        %1690 = vmatpush1.bf16.msra.mxu0 %v1359
        %1691 = vmatprep.subr.bf16.mxu0 %v1364
        %1692 = vmatpush1.bf16.msra.mxu0 %v1363
        %1693 = vmatprep.subr.bf16.mxu0 %v1368
        %1694 = vmatpush1.bf16.msra.mxu0 %v1367
        %1695 = vmatprep.subr.bf16.mxu0 %v1372
        %1696 = vmatpush1.bf16.msra.mxu0 %v1371
        %1697 = vmatprep.mubr.bf16.mxu0 %v587
        %1698 = vmatmul.mubr.bf16.gmra.mrb[0].mxu0 %v586
        %v1699 = vpop.f32.mrb[0].mxu0
        %v1700 = vadd.f32 %v1657, %v1699
        %v1701 = vpop.f32.mrb[0].mxu0
        %v1702 = vadd.f32 %v1659, %v1701
        %v1703 = vpop.f32.mrb[0].mxu0
        %v1704 = vadd.f32 %v1661, %v1703
        %v1705 = vpop.f32.mrb[0].mxu0
        %v1706 = vadd.f32 %v1663, %v1705
        %1707 = vdwg.mxu0
        %1708 = vmatprep.subr.bf16.mxu0 %v1376
        %1709 = vmatpush1.bf16.msra.mxu0 %v1375
        %1710 = vmatprep.subr.bf16.mxu0 0
        %1711 = vmatpush1.bf16.msra.mxu0 0
        %1712 = vmatprep.subr.bf16.mxu0 0
        %1713 = vmatpush1.bf16.msra.mxu0 0
        %1714 = vmatprep.subr.bf16.mxu0 0
        %1715 = vmatpush1.bf16.msra.mxu0 0
        %1716 = vmatprep.subr.bf16.mxu0 0
        %1717 = vmatpush1.bf16.msra.mxu0 0
        %1718 = vmatprep.subr.bf16.mxu0 0
        %1719 = vmatpush1.bf16.msra.mxu0 0
        %1720 = vmatprep.subr.bf16.mxu0 0
        %1721 = vmatpush1.bf16.msra.mxu0 0
        %1722 = vmatprep.subr.bf16.mxu0 0
        %1723 = vmatpush1.bf16.msra.mxu0 0
        %1724 = vmatprep.subr.bf16.mxu0 0
        %1725 = vmatpush1.bf16.msra.mxu0 0
        %1726 = vmatprep.subr.bf16.mxu0 0
        %1727 = vmatpush1.bf16.msra.mxu0 0
        %1728 = vmatprep.subr.bf16.mxu0 0
        %1729 = vmatpush1.bf16.msra.mxu0 0
        %1730 = vmatprep.subr.bf16.mxu0 0
        %1731 = vmatpush1.bf16.msra.mxu0 0
        %1732 = vmatprep.subr.bf16.mxu0 0
        %1733 = vmatpush1.bf16.msra.mxu0 0
        %1734 = vmatprep.subr.bf16.mxu0 0
        %1735 = vmatpush1.bf16.msra.mxu0 0
        %1736 = vmatprep.subr.bf16.mxu0 0
        %1737 = vmatpush1.bf16.msra.mxu0 0
        %1738 = vmatprep.subr.bf16.mxu0 0
        %1739 = vmatpush1.bf16.msra.mxu0 0
        %1740 = vmatprep.mubr.bf16.mxu0 0
        %1741 = vmatmul.mubr.bf16.gmra.mrb[0].mxu0 %v1577
        %v1742 = vpop.f32.mrb[0].mxu0
        %v1743 = vadd.f32 %v1700, %v1742
        %v1744 = vpop.f32.mrb[0].mxu0
        %v1745 = vadd.f32 %v1702, %v1744
        %v1746 = vpop.f32.mrb[0].mxu0
        %v1747 = vadd.f32 %v1704, %v1746
        %v1748 = vpop.f32.mrb[0].mxu0
        %v1749 = vadd.f32 %v1706, %v1748
        %1750 = vdwg.mxu0
        %1751 = vmatprep.subr.bf16.mxu0 %v1186
        %1752 = vmatpush1.bf16.msra.mxu0 %v1185
        %1753 = vmatprep.subr.bf16.mxu0 %v1190
        %1754 = vmatpush1.bf16.msra.mxu0 %v1189
        %1755 = vmatprep.subr.bf16.mxu0 %v1194
        %1756 = vmatpush1.bf16.msra.mxu0 %v1193
        %1757 = vmatprep.subr.bf16.mxu0 %v1198
        %1758 = vmatpush1.bf16.msra.mxu0 %v1197
        %1759 = vmatprep.subr.bf16.mxu0 %v1202
        %1760 = vmatpush1.bf16.msra.mxu0 %v1201
        %1761 = vmatprep.subr.bf16.mxu0 %v1206
        %1762 = vmatpush1.bf16.msra.mxu0 %v1205
        %1763 = vmatprep.subr.bf16.mxu0 %v1210
        %1764 = vmatpush1.bf16.msra.mxu0 %v1209
        %1765 = vmatprep.subr.bf16.mxu0 %v1214
        %1766 = vmatpush1.bf16.msra.mxu0 %v1213
        %1767 = vmatprep.subr.bf16.mxu0 %v1218
        %1768 = vmatpush1.bf16.msra.mxu0 %v1217
        %1769 = vmatprep.subr.bf16.mxu0 %v1222
        %1770 = vmatpush1.bf16.msra.mxu0 %v1221
        %1771 = vmatprep.subr.bf16.mxu0 %v1226
        %1772 = vmatpush1.bf16.msra.mxu0 %v1225
        %1773 = vmatprep.subr.bf16.mxu0 %v1230
        %1774 = vmatpush1.bf16.msra.mxu0 %v1229
        %1775 = vmatprep.subr.bf16.mxu0 %v1234
        %1776 = vmatpush1.bf16.msra.mxu0 %v1233
        %1777 = vmatprep.subr.bf16.mxu0 %v1238
        %1778 = vmatpush1.bf16.msra.mxu0 %v1237
        %1779 = vmatprep.subr.bf16.mxu0 %v1242
        %1780 = vmatpush1.bf16.msra.mxu0 %v1241
        %1781 = vmatprep.subr.bf16.mxu0 %v1246
        %1782 = vmatpush1.bf16.msra.mxu0 %v1245
        %1783 = vmatprep.mubr.bf16.mxu0 %v583
        %1784 = vmatmul.mubr.bf16.gmra.mrb[0].mxu0 %v582
        %v1785 = vpop.f32.mrb[0].mxu0
        %v1786 = vadd.f32 %v551, %v1785
        %v1787 = vpop.f32.mrb[0].mxu0
        %v1788 = vadd.f32 %v555, %v1787
        %v1789 = vpop.f32.mrb[0].mxu0
        %v1790 = vadd.f32 %v551, %v1789
        %v1791 = vpop.f32.mrb[0].mxu0
        %v1792 = vadd.f32 %v555, %v1791
        %1793 = vdwg.mxu0
        %1794 = vmatprep.subr.bf16.mxu0 %v1250
        %1795 = vmatpush1.bf16.msra.mxu0 %v1249
        %1796 = vmatprep.subr.bf16.mxu0 %v1254
        %1797 = vmatpush1.bf16.msra.mxu0 %v1253
        %1798 = vmatprep.subr.bf16.mxu0 %v1258
        %1799 = vmatpush1.bf16.msra.mxu0 %v1257
        %1800 = vmatprep.subr.bf16.mxu0 %v1262
        %1801 = vmatpush1.bf16.msra.mxu0 %v1261
        %1802 = vmatprep.subr.bf16.mxu0 %v1266
        %1803 = vmatpush1.bf16.msra.mxu0 %v1265
        %1804 = vmatprep.subr.bf16.mxu0 %v1270
        %1805 = vmatpush1.bf16.msra.mxu0 %v1269
        %1806 = vmatprep.subr.bf16.mxu0 %v1274
        %1807 = vmatpush1.bf16.msra.mxu0 %v1273
        %1808 = vmatprep.subr.bf16.mxu0 %v1278
        %1809 = vmatpush1.bf16.msra.mxu0 %v1277
        %1810 = vmatprep.subr.bf16.mxu0 %v1282
        %1811 = vmatpush1.bf16.msra.mxu0 %v1281
        %1812 = vmatprep.subr.bf16.mxu0 %v1286
        %1813 = vmatpush1.bf16.msra.mxu0 %v1285
        %1814 = vmatprep.subr.bf16.mxu0 %v1290
        %1815 = vmatpush1.bf16.msra.mxu0 %v1289
        %1816 = vmatprep.subr.bf16.mxu0 %v1294
        %1817 = vmatpush1.bf16.msra.mxu0 %v1293
        %1818 = vmatprep.subr.bf16.mxu0 %v1298
        %1819 = vmatpush1.bf16.msra.mxu0 %v1297
        %1820 = vmatprep.subr.bf16.mxu0 %v1302
        %1821 = vmatpush1.bf16.msra.mxu0 %v1301
        %1822 = vmatprep.subr.bf16.mxu0 %v1306
        %1823 = vmatpush1.bf16.msra.mxu0 %v1305
        %1824 = vmatprep.subr.bf16.mxu0 %v1310
        %1825 = vmatpush1.bf16.msra.mxu0 %v1309
        %1826 = vmatprep.mubr.bf16.mxu0 %v585
        %1827 = vmatmul.mubr.bf16.gmra.mrb[0].mxu0 %v584
        %v1828 = vpop.f32.mrb[0].mxu0
        %v1829 = vadd.f32 %v1786, %v1828
        %v1830 = vpop.f32.mrb[0].mxu0
        %v1831 = vadd.f32 %v1788, %v1830
        %v1832 = vpop.f32.mrb[0].mxu0
        %v1833 = vadd.f32 %v1790, %v1832
        %v1834 = vpop.f32.mrb[0].mxu0
        %v1835 = vadd.f32 %v1792, %v1834
        %1836 = vdwg.mxu0
        %1837 = vmatprep.subr.bf16.mxu0 %v1314
        %1838 = vmatpush1.bf16.msra.mxu0 %v1313
        %1839 = vmatprep.subr.bf16.mxu0 %v1318
        %1840 = vmatpush1.bf16.msra.mxu0 %v1317
        %1841 = vmatprep.subr.bf16.mxu0 %v1322
        %1842 = vmatpush1.bf16.msra.mxu0 %v1321
        %1843 = vmatprep.subr.bf16.mxu0 %v1326
        %1844 = vmatpush1.bf16.msra.mxu0 %v1325
        %1845 = vmatprep.subr.bf16.mxu0 %v1330
        %1846 = vmatpush1.bf16.msra.mxu0 %v1329
        %1847 = vmatprep.subr.bf16.mxu0 %v1334
        %1848 = vmatpush1.bf16.msra.mxu0 %v1333
        %1849 = vmatprep.subr.bf16.mxu0 %v1338
        %1850 = vmatpush1.bf16.msra.mxu0 %v1337
        %1851 = vmatprep.subr.bf16.mxu0 %v1342
        %1852 = vmatpush1.bf16.msra.mxu0 %v1341
        %1853 = vmatprep.subr.bf16.mxu0 %v1346
        %1854 = vmatpush1.bf16.msra.mxu0 %v1345
        %1855 = vmatprep.subr.bf16.mxu0 %v1350
        %1856 = vmatpush1.bf16.msra.mxu0 %v1349
        %1857 = vmatprep.subr.bf16.mxu0 %v1354
        %1858 = vmatpush1.bf16.msra.mxu0 %v1353
        %1859 = vmatprep.subr.bf16.mxu0 %v1358
        %1860 = vmatpush1.bf16.msra.mxu0 %v1357
        %1861 = vmatprep.subr.bf16.mxu0 %v1362
        %1862 = vmatpush1.bf16.msra.mxu0 %v1361
        %1863 = vmatprep.subr.bf16.mxu0 %v1366
        %1864 = vmatpush1.bf16.msra.mxu0 %v1365
        %1865 = vmatprep.subr.bf16.mxu0 %v1370
        %1866 = vmatpush1.bf16.msra.mxu0 %v1369
        %1867 = vmatprep.subr.bf16.mxu0 %v1374
        %1868 = vmatpush1.bf16.msra.mxu0 %v1373
        %1869 = vmatprep.mubr.bf16.mxu0 %v587
        %1870 = vmatmul.mubr.bf16.gmra.mrb[0].mxu0 %v586
        %v1871 = vpop.f32.mrb[0].mxu0
        %v1872 = vadd.f32 %v1829, %v1871
        %v1873 = vpop.f32.mrb[0].mxu0
        %v1874 = vadd.f32 %v1831, %v1873
        %v1875 = vpop.f32.mrb[0].mxu0
        %v1876 = vadd.f32 %v1833, %v1875
        %v1877 = vpop.f32.mrb[0].mxu0
        %v1878 = vadd.f32 %v1835, %v1877
        %1879 = vdwg.mxu0
        %1880 = vmatprep.subr.bf16.mxu0 %v1378
        %1881 = vmatpush1.bf16.msra.mxu0 %v1377
        %1882 = vmatprep.subr.bf16.mxu0 0
        %1883 = vmatpush1.bf16.msra.mxu0 0
        %1884 = vmatprep.subr.bf16.mxu0 0
        %1885 = vmatpush1.bf16.msra.mxu0 0
        %1886 = vmatprep.subr.bf16.mxu0 0
        %1887 = vmatpush1.bf16.msra.mxu0 0
        %1888 = vmatprep.subr.bf16.mxu0 0
        %1889 = vmatpush1.bf16.msra.mxu0 0
        %1890 = vmatprep.subr.bf16.mxu0 0
        %1891 = vmatpush1.bf16.msra.mxu0 0
        %1892 = vmatprep.subr.bf16.mxu0 0
        %1893 = vmatpush1.bf16.msra.mxu0 0
        %1894 = vmatprep.subr.bf16.mxu0 0
        %1895 = vmatpush1.bf16.msra.mxu0 0
        %1896 = vmatprep.subr.bf16.mxu0 0
        %1897 = vmatpush1.bf16.msra.mxu0 0
        %1898 = vmatprep.subr.bf16.mxu0 0
        %1899 = vmatpush1.bf16.msra.mxu0 0
        %1900 = vmatprep.subr.bf16.mxu0 0
        %1901 = vmatpush1.bf16.msra.mxu0 0
        %1902 = vmatprep.subr.bf16.mxu0 0
        %1903 = vmatpush1.bf16.msra.mxu0 0
        %1904 = vmatprep.subr.bf16.mxu0 0
        %1905 = vmatpush1.bf16.msra.mxu0 0
        %1906 = vmatprep.subr.bf16.mxu0 0
        %1907 = vmatpush1.bf16.msra.mxu0 0
        %1908 = vmatprep.subr.bf16.mxu0 0
        %1909 = vmatpush1.bf16.msra.mxu0 0
        %1910 = vmatprep.subr.bf16.mxu0 0
        %1911 = vmatpush1.bf16.msra.mxu0 0
        %1912 = vmatprep.mubr.bf16.mxu0 0
        %1913 = vmatmul.mubr.bf16.gmra.mrb[0].mxu0 %v1577
        %v1914 = vpop.f32.mrb[0].mxu0
        %v1915 = vadd.f32 %v1872, %v1914
        %v1916 = vpop.f32.mrb[0].mxu0
        %v1917 = vadd.f32 %v1874, %v1916
        %v1918 = vpop.f32.mrb[0].mxu0
        %v1919 = vadd.f32 %v1876, %v1918
        %v1920 = vpop.f32.mrb[0].mxu0
        %v1921 = vadd.f32 %v1878, %v1920
        %1922 = vdwg.mxu0
        %v1923 = vmul.f32 %v1743, 0.2
        %v1924 = vmul.f32 %v1745, 0.2
        %v1925 = vmul.f32 %v1915, 0.2
        %v1926 = vmul.f32 %v1917, 0.2
        %v1927 = vmul.f32 %v1747, 0.2
        %v1928 = vmul.f32 %v1749, 0.2
        %v1929 = vmul.f32 %v1919, 0.2
        %v1930 = vmul.f32 %v1921, 0.2
        %v1931 = vmax.f32 %v1743, %v1923
        %v1932 = vmax.f32 %v1745, %v1924
        %v1933 = vmax.f32 %v1915, %v1925
        %v1934 = vmax.f32 %v1917, %v1926
        %v1935 = vmax.f32 %v1747, %v1927
        %v1936 = vmax.f32 %v1749, %v1928
        %v1937 = vmax.f32 %v1919, %v1929
        %v1938 = vmax.f32 %v1921, %v1930
        %v1939 = vpack.c.bf16 %v1935, %v1931
        %v1940 = vpack.c.bf16 %v1936, %v1932
        %v1941 = vpack.c.bf16 %v1937, %v1933
        %v1942 = vpack.c.bf16 %v1938, %v1934
        %v1943 = vld [vmem:[#allocation7] sm:$0xff]
        %v1944 = vld [vmem:[#allocation7 + $0x8] sm:$0xff]
        %v1945 = vld [vmem:[#allocation7 + $0x10] sm:$0xff]
        %v1946 = vld [vmem:[#allocation7 + $0x18] sm:$0xff]
        %v1947 = vld [vmem:[#allocation7 + $0x20] sm:$0xff]
        %v1948 = vld [vmem:[#allocation7 + $0x28] sm:$0xff]
        %v1949 = vld [vmem:[#allocation7 + $0x30] sm:$0xff]
        %v1950 = vld [vmem:[#allocation7 + $0x38] sm:$0xff]
        %v1951 = vld [vmem:[#allocation7 + $0x40] sm:$0xff]
        %v1952 = vld [vmem:[#allocation7 + $0x48] sm:$0xff]
        %v1953 = vld [vmem:[#allocation7 + $0x50] sm:$0xff]
        %v1954 = vld [vmem:[#allocation7 + $0x58] sm:$0xff]
        %v1955 = vld [vmem:[#allocation7 + $0x60] sm:$0xff]
        %v1956 = vld [vmem:[#allocation7 + $0x68] sm:$0xff]
        %v1957 = vld [vmem:[#allocation7 + $0x70] sm:$0xff]
        %v1958 = vld [vmem:[#allocation7 + $0x78] sm:$0xff]
        %v1959 = vld [vmem:[#allocation7 + $0x80] sm:$0xff]
        %v1960 = vld [vmem:[#allocation7 + $0x88] sm:$0xff]
        %v1961 = vld [vmem:[#allocation7 + $0x90] sm:$0xff]
        %v1962 = vld [vmem:[#allocation7 + $0x98] sm:$0xff]
        %v1963 = vld [vmem:[#allocation7 + $0xa0] sm:$0xff]
        %v1964 = vld [vmem:[#allocation7 + $0xa8] sm:$0xff]
        %v1965 = vld [vmem:[#allocation7 + $0xb0] sm:$0xff]
        %v1966 = vld [vmem:[#allocation7 + $0xb8] sm:$0xff]
        %v1967 = vld [vmem:[#allocation7 + $0xc0] sm:$0xff]
        %v1968 = vld [vmem:[#allocation7 + $0xc8] sm:$0xff]
        %v1969 = vld [vmem:[#allocation7 + $0xd0] sm:$0xff]
        %v1970 = vld [vmem:[#allocation7 + $0xd8] sm:$0xff]
        %v1971 = vld [vmem:[#allocation7 + $0xe0] sm:$0xff]
        %v1972 = vld [vmem:[#allocation7 + $0xe8] sm:$0xff]
        %v1973 = vld [vmem:[#allocation7 + $0xf0] sm:$0xff]
        %v1974 = vld [vmem:[#allocation7 + $0xf8] sm:$0xff]
        %v1975 = vld [vmem:[#allocation7 + $0x100] sm:$0xff]
        %v1976 = vld [vmem:[#allocation7 + $0x108] sm:$0xff]
        %v1977 = vld [vmem:[#allocation7 + $0x110] sm:$0xff]
        %v1978 = vld [vmem:[#allocation7 + $0x118] sm:$0xff]
        %v1979 = vld [vmem:[#allocation7 + $0x120] sm:$0xff]
        %v1980 = vld [vmem:[#allocation7 + $0x128] sm:$0xff]
        %v1981 = vld [vmem:[#allocation7 + $0x130] sm:$0xff]
        %v1982 = vld [vmem:[#allocation7 + $0x138] sm:$0xff]
        %v1983 = vld [vmem:[#allocation7 + $0x140] sm:$0xff]
        %v1984 = vld [vmem:[#allocation7 + $0x148] sm:$0xff]
        %v1985 = vld [vmem:[#allocation7 + $0x150] sm:$0xff]
        %v1986 = vld [vmem:[#allocation7 + $0x158] sm:$0xff]
        %v1987 = vld [vmem:[#allocation7 + $0x160] sm:$0xff]
        %v1988 = vld [vmem:[#allocation7 + $0x168] sm:$0xff]
        %v1989 = vld [vmem:[#allocation7 + $0x170] sm:$0xff]
        %v1990 = vld [vmem:[#allocation7 + $0x178] sm:$0xff]
        %v1991 = vld [vmem:[#allocation7 + $0x180] sm:$0xff]
        %v1992 = vld [vmem:[#allocation7 + $0x188] sm:$0xff]
        %v1993 = vld [vmem:[#allocation7 + $0x190] sm:$0xff]
        %v1994 = vld [vmem:[#allocation7 + $0x198] sm:$0xff]
        %v1995 = vld [vmem:[#allocation7 + $0x1a0] sm:$0xff]
        %v1996 = vld [vmem:[#allocation7 + $0x1a8] sm:$0xff]
        %v1997 = vld [vmem:[#allocation7 + $0x1b0] sm:$0xff]
        %v1998 = vld [vmem:[#allocation7 + $0x1b8] sm:$0xff]
        %v1999 = vld [vmem:[#allocation7 + $0x1c0] sm:$0xff]
        %v2000 = vld [vmem:[#allocation7 + $0x1c8] sm:$0xff]
        %v2001 = vld [vmem:[#allocation7 + $0x1d0] sm:$0xff]
        %v2002 = vld [vmem:[#allocation7 + $0x1d8] sm:$0xff]
        %v2003 = vld [vmem:[#allocation7 + $0x1e0] sm:$0xff]
        %v2004 = vld [vmem:[#allocation7 + $0x1e8] sm:$0xff]
        %v2005 = vld [vmem:[#allocation7 + $0x1f0] sm:$0xff]
        %v2006 = vld [vmem:[#allocation7 + $0x1f8] sm:$0xff]
        %v2007 = vld [vmem:[%s4] sm:$0x3]
        %v2009 = vlaneseq
        %v2010 = vshrl.u32 %v2009, 7
        %v2011 = vsub.s32 0, %v2010
        %v2012 = vrot.slane %v2007, %v2011
        %v2013 = vlaneseq
        %v2014 = vshrl.u32 %v2013, 7
        %v2015 = vsub.s32 1, %v2014
        %v2016 = vrot.slane %v2007, %v2015
        %v2083 = vunpack.c.l.b16 %v1943
        %v2084 = vunpack.c.h.b16 %v1943
        %v2085 = vunpack.c.l.b16 %v1944
        %v2086 = vunpack.c.h.b16 %v1944
        %v2087 = vunpack.c.l.b16 %v1945
        %v2088 = vunpack.c.h.b16 %v1945
        %v2089 = vunpack.c.l.b16 %v1946
        %v2090 = vunpack.c.h.b16 %v1946
        %v2091 = vunpack.c.l.b16 %v1947
        %v2092 = vunpack.c.h.b16 %v1947
        %v2093 = vunpack.c.l.b16 %v1948
        %v2094 = vunpack.c.h.b16 %v1948
        %v2095 = vunpack.c.l.b16 %v1949
        %v2096 = vunpack.c.h.b16 %v1949
        %v2097 = vunpack.c.l.b16 %v1950
        %v2098 = vunpack.c.h.b16 %v1950
        %v2099 = vunpack.c.l.b16 %v1951
        %v2100 = vunpack.c.h.b16 %v1951
        %v2101 = vunpack.c.l.b16 %v1952
        %v2102 = vunpack.c.h.b16 %v1952
        %v2103 = vunpack.c.l.b16 %v1953
        %v2104 = vunpack.c.h.b16 %v1953
        %v2105 = vunpack.c.l.b16 %v1954
        %v2106 = vunpack.c.h.b16 %v1954
        %v2107 = vunpack.c.l.b16 %v1955
        %v2108 = vunpack.c.h.b16 %v1955
        %v2109 = vunpack.c.l.b16 %v1956
        %v2110 = vunpack.c.h.b16 %v1956
        %v2111 = vunpack.c.l.b16 %v1957
        %v2112 = vunpack.c.h.b16 %v1957
        %v2113 = vunpack.c.l.b16 %v1958
        %v2114 = vunpack.c.h.b16 %v1958
        %v2115 = vunpack.c.l.b16 %v1959
        %v2116 = vunpack.c.h.b16 %v1959
        %v2117 = vunpack.c.l.b16 %v1960
        %v2118 = vunpack.c.h.b16 %v1960
        %v2119 = vunpack.c.l.b16 %v1961
        %v2120 = vunpack.c.h.b16 %v1961
        %v2121 = vunpack.c.l.b16 %v1962
        %v2122 = vunpack.c.h.b16 %v1962
        %v2123 = vunpack.c.l.b16 %v1963
        %v2124 = vunpack.c.h.b16 %v1963
        %v2125 = vunpack.c.l.b16 %v1964
        %v2126 = vunpack.c.h.b16 %v1964
        %v2127 = vunpack.c.l.b16 %v1965
        %v2128 = vunpack.c.h.b16 %v1965
        %v2129 = vunpack.c.l.b16 %v1966
        %v2130 = vunpack.c.h.b16 %v1966
        %v2131 = vunpack.c.l.b16 %v1967
        %v2132 = vunpack.c.h.b16 %v1967
        %v2133 = vunpack.c.l.b16 %v1968
        %v2134 = vunpack.c.h.b16 %v1968
        %v2135 = vunpack.c.l.b16 %v1969
        %v2136 = vunpack.c.h.b16 %v1969
        %v2137 = vunpack.c.l.b16 %v1970
        %v2138 = vunpack.c.h.b16 %v1970
        %v2139 = vunpack.c.l.b16 %v1971
        %v2140 = vunpack.c.h.b16 %v1971
        %v2141 = vunpack.c.l.b16 %v1972
        %v2142 = vunpack.c.h.b16 %v1972
        %v2143 = vunpack.c.l.b16 %v1973
        %v2144 = vunpack.c.h.b16 %v1973
        %v2145 = vunpack.c.l.b16 %v1974
        %v2146 = vunpack.c.h.b16 %v1974
        %v2147 = vunpack.c.l.b16 %v1975
        %v2148 = vunpack.c.h.b16 %v1975
        %v2149 = vunpack.c.l.b16 %v1976
        %v2150 = vunpack.c.h.b16 %v1976
        %v2151 = vunpack.c.l.b16 %v1977
        %v2152 = vunpack.c.h.b16 %v1977
        %v2153 = vunpack.c.l.b16 %v1978
        %v2154 = vunpack.c.h.b16 %v1978
        %v2155 = vunpack.c.l.b16 %v1979
        %v2156 = vunpack.c.h.b16 %v1979
        %v2157 = vunpack.c.l.b16 %v1980
        %v2158 = vunpack.c.h.b16 %v1980
        %v2159 = vunpack.c.l.b16 %v1981
        %v2160 = vunpack.c.h.b16 %v1981
        %v2161 = vunpack.c.l.b16 %v1982
        %v2162 = vunpack.c.h.b16 %v1982
        %v2163 = vunpack.c.l.b16 %v1983
        %v2164 = vunpack.c.h.b16 %v1983
        %v2165 = vunpack.c.l.b16 %v1984
        %v2166 = vunpack.c.h.b16 %v1984
        %v2167 = vunpack.c.l.b16 %v1985
        %v2168 = vunpack.c.h.b16 %v1985
        %v2169 = vunpack.c.l.b16 %v1986
        %v2170 = vunpack.c.h.b16 %v1986
        %v2171 = vunpack.c.l.b16 %v1987
        %v2172 = vunpack.c.h.b16 %v1987
        %v2173 = vunpack.c.l.b16 %v1988
        %v2174 = vunpack.c.h.b16 %v1988
        %v2175 = vunpack.c.l.b16 %v1989
        %v2176 = vunpack.c.h.b16 %v1989
        %v2177 = vunpack.c.l.b16 %v1990
        %v2178 = vunpack.c.h.b16 %v1990
        %v2179 = vunpack.c.l.b16 %v1991
        %v2180 = vunpack.c.h.b16 %v1991
        %v2181 = vunpack.c.l.b16 %v1992
        %v2182 = vunpack.c.h.b16 %v1992
        %v2183 = vunpack.c.l.b16 %v1993
        %v2184 = vunpack.c.h.b16 %v1993
        %v2185 = vunpack.c.l.b16 %v1994
        %v2186 = vunpack.c.h.b16 %v1994
        %v2187 = vunpack.c.l.b16 %v1995
        %v2188 = vunpack.c.h.b16 %v1995
        %v2189 = vunpack.c.l.b16 %v1996
        %v2190 = vunpack.c.h.b16 %v1996
        %v2191 = vunpack.c.l.b16 %v1997
        %v2192 = vunpack.c.h.b16 %v1997
        %v2193 = vunpack.c.l.b16 %v1998
        %v2194 = vunpack.c.h.b16 %v1998
        %v2195 = vunpack.c.l.b16 %v1999
        %v2196 = vunpack.c.h.b16 %v1999
        %v2197 = vunpack.c.l.b16 %v2000
        %v2198 = vunpack.c.h.b16 %v2000
        %v2199 = vunpack.c.l.b16 %v2001
        %v2200 = vunpack.c.h.b16 %v2001
        %v2201 = vunpack.c.l.b16 %v2002
        %v2202 = vunpack.c.h.b16 %v2002
        %v2203 = vunpack.c.l.b16 %v2003
        %v2204 = vunpack.c.h.b16 %v2003
        %v2205 = vunpack.c.l.b16 %v2004
        %v2206 = vunpack.c.h.b16 %v2004
        %v2207 = vunpack.c.l.b16 %v2005
        %v2208 = vunpack.c.h.b16 %v2005
        %v2209 = vunpack.c.l.b16 %v2006
        %v2210 = vunpack.c.h.b16 %v2006
        %v2211 = vpack.c.b16 %v2085, %v2083
        %v2212 = vpack.c.b16 %v2086, %v2084
        %v2213 = vpack.c.b16 %v2089, %v2087
        %v2214 = vpack.c.b16 %v2090, %v2088
        %v2215 = vpack.c.b16 %v2093, %v2091
        %v2216 = vpack.c.b16 %v2094, %v2092
        %v2217 = vpack.c.b16 %v2097, %v2095
        %v2218 = vpack.c.b16 %v2098, %v2096
        %v2219 = vpack.c.b16 %v2101, %v2099
        %v2220 = vpack.c.b16 %v2102, %v2100
        %v2221 = vpack.c.b16 %v2105, %v2103
        %v2222 = vpack.c.b16 %v2106, %v2104
        %v2223 = vpack.c.b16 %v2109, %v2107
        %v2224 = vpack.c.b16 %v2110, %v2108
        %v2225 = vpack.c.b16 %v2113, %v2111
        %v2226 = vpack.c.b16 %v2114, %v2112
        %v2227 = vpack.c.b16 %v2117, %v2115
        %v2228 = vpack.c.b16 %v2118, %v2116
        %v2229 = vpack.c.b16 %v2121, %v2119
        %v2230 = vpack.c.b16 %v2122, %v2120
        %v2231 = vpack.c.b16 %v2125, %v2123
        %v2232 = vpack.c.b16 %v2126, %v2124
        %v2233 = vpack.c.b16 %v2129, %v2127
        %v2234 = vpack.c.b16 %v2130, %v2128
        %v2235 = vpack.c.b16 %v2133, %v2131
        %v2236 = vpack.c.b16 %v2134, %v2132
        %v2237 = vpack.c.b16 %v2137, %v2135
        %v2238 = vpack.c.b16 %v2138, %v2136
        %v2239 = vpack.c.b16 %v2141, %v2139
        %v2240 = vpack.c.b16 %v2142, %v2140
        %v2241 = vpack.c.b16 %v2145, %v2143
        %v2242 = vpack.c.b16 %v2146, %v2144
        %v2243 = vpack.c.b16 %v2149, %v2147
        %v2244 = vpack.c.b16 %v2150, %v2148
        %v2245 = vpack.c.b16 %v2153, %v2151
        %v2246 = vpack.c.b16 %v2154, %v2152
        %v2247 = vpack.c.b16 %v2157, %v2155
        %v2248 = vpack.c.b16 %v2158, %v2156
        %v2249 = vpack.c.b16 %v2161, %v2159
        %v2250 = vpack.c.b16 %v2162, %v2160
        %v2251 = vpack.c.b16 %v2165, %v2163
        %v2252 = vpack.c.b16 %v2166, %v2164
        %v2253 = vpack.c.b16 %v2169, %v2167
        %v2254 = vpack.c.b16 %v2170, %v2168
        %v2255 = vpack.c.b16 %v2173, %v2171
        %v2256 = vpack.c.b16 %v2174, %v2172
        %v2257 = vpack.c.b16 %v2177, %v2175
        %v2258 = vpack.c.b16 %v2178, %v2176
        %v2259 = vpack.c.b16 %v2181, %v2179
        %v2260 = vpack.c.b16 %v2182, %v2180
        %v2261 = vpack.c.b16 %v2185, %v2183
        %v2262 = vpack.c.b16 %v2186, %v2184
        %v2263 = vpack.c.b16 %v2189, %v2187
        %v2264 = vpack.c.b16 %v2190, %v2188
        %v2265 = vpack.c.b16 %v2193, %v2191
        %v2266 = vpack.c.b16 %v2194, %v2192
        %v2267 = vpack.c.b16 %v2197, %v2195
        %v2268 = vpack.c.b16 %v2198, %v2196
        %v2269 = vpack.c.b16 %v2201, %v2199
        %v2270 = vpack.c.b16 %v2202, %v2200
        %v2271 = vpack.c.b16 %v2205, %v2203
        %v2272 = vpack.c.b16 %v2206, %v2204
        %v2273 = vpack.c.b16 %v2209, %v2207
        %v2274 = vpack.c.b16 %v2210, %v2208
        %2339 = vmatprep.subr.bf16.mxu0 %v2212
        %2340 = vmatpush1.bf16.msra.mxu0 %v2211
        %2341 = vmatprep.subr.bf16.mxu0 %v2214
        %2342 = vmatpush1.bf16.msra.mxu0 %v2213
        %2343 = vmatprep.subr.bf16.mxu0 %v2216
        %2344 = vmatpush1.bf16.msra.mxu0 %v2215
        %2345 = vmatprep.subr.bf16.mxu0 %v2218
        %2346 = vmatpush1.bf16.msra.mxu0 %v2217
        %2347 = vmatprep.subr.bf16.mxu0 %v2220
        %2348 = vmatpush1.bf16.msra.mxu0 %v2219
        %2349 = vmatprep.subr.bf16.mxu0 %v2222
        %2350 = vmatpush1.bf16.msra.mxu0 %v2221
        %2351 = vmatprep.subr.bf16.mxu0 %v2224
        %2352 = vmatpush1.bf16.msra.mxu0 %v2223
        %2353 = vmatprep.subr.bf16.mxu0 %v2226
        %2354 = vmatpush1.bf16.msra.mxu0 %v2225
        %2355 = vmatprep.subr.bf16.mxu0 %v2228
        %2356 = vmatpush1.bf16.msra.mxu0 %v2227
        %2357 = vmatprep.subr.bf16.mxu0 %v2230
        %2358 = vmatpush1.bf16.msra.mxu0 %v2229
        %2359 = vmatprep.subr.bf16.mxu0 %v2232
        %2360 = vmatpush1.bf16.msra.mxu0 %v2231
        %2361 = vmatprep.subr.bf16.mxu0 %v2234
        %2362 = vmatpush1.bf16.msra.mxu0 %v2233
        %2363 = vmatprep.subr.bf16.mxu0 %v2236
        %2364 = vmatpush1.bf16.msra.mxu0 %v2235
        %2365 = vmatprep.subr.bf16.mxu0 %v2238
        %2366 = vmatpush1.bf16.msra.mxu0 %v2237
        %2367 = vmatprep.subr.bf16.mxu0 %v2240
        %2368 = vmatpush1.bf16.msra.mxu0 %v2239
        %2369 = vmatprep.subr.bf16.mxu0 %v2242
        %2370 = vmatpush1.bf16.msra.mxu0 %v2241
        %2371 = vmatprep.mubr.bf16.mxu0 %v1940
        %2372 = vmatmul.mubr.bf16.gmra.mrb[0].mxu0 %v1939
        %v2373 = vpop.f32.mrb[0].mxu0
        %v2374 = vadd.f32 %v2012, %v2373
        %v2375 = vpop.f32.mrb[0].mxu0
        %v2376 = vadd.f32 %v2016, %v2375
        %v2377 = vpop.f32.mrb[0].mxu0
        %v2378 = vadd.f32 %v2012, %v2377
        %v2379 = vpop.f32.mrb[0].mxu0
        %v2380 = vadd.f32 %v2016, %v2379
        %2381 = vdwg.mxu0
        %2382 = vmatprep.subr.bf16.mxu0 %v2244
        %2383 = vmatpush1.bf16.msra.mxu0 %v2243
        %2384 = vmatprep.subr.bf16.mxu0 %v2246
        %2385 = vmatpush1.bf16.msra.mxu0 %v2245
        %2386 = vmatprep.subr.bf16.mxu0 %v2248
        %2387 = vmatpush1.bf16.msra.mxu0 %v2247
        %2388 = vmatprep.subr.bf16.mxu0 %v2250
        %2389 = vmatpush1.bf16.msra.mxu0 %v2249
        %2390 = vmatprep.subr.bf16.mxu0 %v2252
        %2391 = vmatpush1.bf16.msra.mxu0 %v2251
        %2392 = vmatprep.subr.bf16.mxu0 %v2254
        %2393 = vmatpush1.bf16.msra.mxu0 %v2253
        %2394 = vmatprep.subr.bf16.mxu0 %v2256
        %2395 = vmatpush1.bf16.msra.mxu0 %v2255
        %2396 = vmatprep.subr.bf16.mxu0 %v2258
        %2397 = vmatpush1.bf16.msra.mxu0 %v2257
        %2398 = vmatprep.subr.bf16.mxu0 %v2260
        %2399 = vmatpush1.bf16.msra.mxu0 %v2259
        %2400 = vmatprep.subr.bf16.mxu0 %v2262
        %2401 = vmatpush1.bf16.msra.mxu0 %v2261
        %2402 = vmatprep.subr.bf16.mxu0 %v2264
        %2403 = vmatpush1.bf16.msra.mxu0 %v2263
        %2404 = vmatprep.subr.bf16.mxu0 %v2266
        %2405 = vmatpush1.bf16.msra.mxu0 %v2265
        %2406 = vmatprep.subr.bf16.mxu0 %v2268
        %2407 = vmatpush1.bf16.msra.mxu0 %v2267
        %2408 = vmatprep.subr.bf16.mxu0 %v2270
        %2409 = vmatpush1.bf16.msra.mxu0 %v2269
        %2410 = vmatprep.subr.bf16.mxu0 %v2272
        %2411 = vmatpush1.bf16.msra.mxu0 %v2271
        %2412 = vmatprep.subr.bf16.mxu0 %v2274
        %2413 = vmatpush1.bf16.msra.mxu0 %v2273
        %2414 = vmatprep.mubr.bf16.mxu0 %v1942
        %2415 = vmatmul.mubr.bf16.gmra.mrb[0].mxu0 %v1941
        %v2416 = vpop.f32.mrb[0].mxu0
        %v2417 = vadd.f32 %v2374, %v2416
        %v2418 = vpop.f32.mrb[0].mxu0
        %v2419 = vadd.f32 %v2376, %v2418
        %v2420 = vpop.f32.mrb[0].mxu0
        %v2421 = vadd.f32 %v2378, %v2420
        %v2422 = vpop.f32.mrb[0].mxu0
        %v2423 = vadd.f32 %v2380, %v2422
        %2424 = vdwg.mxu0
        %v2425 = vmul.f32 %v2417, 0.2
        %v2426 = vmul.f32 %v2419, 0.2
        %v2427 = vmul.f32 %v2421, 0.2
        %v2428 = vmul.f32 %v2423, 0.2
        %v2429 = vmax.f32 %v2417, %v2425
        %v2430 = vmax.f32 %v2419, %v2426
        %v2431 = vmax.f32 %v2421, %v2427
        %v2432 = vmax.f32 %v2423, %v2428
        %v2433 = vld [vmem:[%s5] sm:$0x3]
        %v2435 = vlaneseq
        %v2436 = vshrl.u32 %v2435, 7
        %v2437 = vsub.s32 0, %v2436
        %v2438 = vrot.slane %v2433, %v2437
        %v2439 = vlaneseq
        %v2440 = vshrl.u32 %v2439, 7
        %v2441 = vsub.s32 1, %v2440
        %v2442 = vrot.slane %v2433, %v2441
        %v2445 = vmul.f32 %v2429, %v2438
        %v2446 = vmul.f32 %v2430, %v2442
        %v2447 = vmul.f32 %v2431, %v2438
        %v2448 = vmul.f32 %v2432, %v2442
        %v2449 = vadd.f32 %v2445, %v2446
        %2450 = vadd.xlane.f32.xlu0 %v2449
        %v2451 = vpop.xlane.xlu0 %2450
        %v2452 = vadd.f32 %v2447, %v2448
        %2453 = vadd.xlane.f32.xlu0 %v2452
        %v2454 = vpop.xlane.xlu0 %2453
        %v2455 = vld [vmem:[#allocation2] sm:$0x1]
        %v2457 = vlaneseq
        %v2458 = vshrl.u32 %v2457, 7
        %v2459 = vsub.s32 0, %v2458
        %v2460 = vrot.slane %v2455, %v2459
        %v2462 = vadd.f32 %v2451, %v2460
        %v2463 = vadd.f32 %v2454, %v2460
        %v2464 = vsub.f32 0.0, %v2462
        %v2465 = vsub.f32 0.0, %v2463
        %v2466 = vmul.f32 %v2464, 1.442695
        %v2467 = vpow.pop %v2466
        %v2468 = vmul.f32 %v2465, 1.442695
        %v2469 = vpow.pop %v2468
        %v2470 = vadd.f32 %v2467, 1.0
        %v2471 = vadd.f32 %v2469, 1.0
        %v2472 = vrcp.pop %v2470
        %v2473 = vrcp.pop %v2471
        %vm2474 = vcmask 7168
        %2475 = vst.msk [vmem:[%s331] sm:$0xff] %vm2474, %v2472
        %2476 = vst.msk [vmem:[%s331 + $0x8] sm:$0xff] %vm2474, %v2473
        %s2477 = smul.u32 2, %s24
        %p2478 = scmp.lt.s32.totalorder %s2477, 5
        %s2479 = scalar_select %p2478, %s2477, 5
        %s2480 = smul.addr %s2479, 8
        %s2481 = scalar_lea.vmem %s7, %s2480
        // Predicated region
        $region61: #{tpu_custom_call.1} parent=47 // pred_check
          %p2482 = pneg %p194
        $region62: #{tpu_custom_call.1} parent=47 // pred_check_branch
          %2484 = sbr.rel (%p2482) target = $region64
        $region63: #{tpu_custom_call.1} parent=47 // pred_region
          %s2485 = smul.u32 2, %s24
        $region64: #{tpu_custom_call.1} parent=47 // pred_fallthru
          _
      $region48: #{tpu_custom_call.1} parent=5 // pred_fallthru
        _
      %p2486 = scmp.le.s32.totalorder 2, %s19
      // Predicated region
      $region65: #{tpu_custom_call.1} parent=5 // pred_check
        %p2487 = pneg %p2486
      $region66: #{tpu_custom_call.1} parent=5 // pred_check_branch
        %2489 = sbr.rel (%p2487) target = $region68
      $region67: #{tpu_custom_call.1} parent=5 // pred_region
        %s2490 = ssub.s32 %s19, 2
        // Predicated region
        $region69: #{tpu_custom_call.1} parent=67 // pred_check
          %p2491 = pneg %p200
        $region70: #{tpu_custom_call.1} parent=67 // pred_check_branch
          %2493 = sbr.rel (%p2491) target = $region72
        $region71: #{tpu_custom_call.1} parent=67 // pred_region
          %s2494 = smul.u32 2, %s25
          %p2495 = scmp.lt.s32.totalorder %s2494, 5
          %s2496 = scalar_select %p2495, %s2494, 5
          %s2497 = smul.addr %s2496, 8
          %s2498 = scalar_lea.vmem %s7, %s2497
        $region72: #{tpu_custom_call.1} parent=67 // pred_fallthru
          _
      $region68: #{tpu_custom_call.1} parent=5 // pred_fallthru
        _
    $region6: #{tpu_custom_call.1} parent=1 // loop_footer
      %s23 = sadd.s32 1, %s19
    $region7: #{tpu_custom_call.1} parent=1 // loop_footer_branch
      %18 = sbr.rel target = $region3
    $region8: #{tpu_custom_call.1} parent=1 // loop_exit
      _
    %2499 = vsyncpa [#allocation4], 1
    %s2500 = scalar_lea.sflag [#allocation4], 1
    %2501 = vsyncpa %s2500, 1
    %2502 = vsyncpa [#allocation6], 1

</llo_original>
